<compile_context>
chip_gen: v7x
topology: tpu7x:2x2x1
jax: 0.10.0
libtpu: 0.0.40
codegen_flags: <defaults>
</compile_context>

<pallas_src>
from collections import deque

import numpy as np
import jax
import jax.numpy as jnp
from jax.experimental import pallas as pl
from jax.experimental.pallas import tpu as pltpu

MAX_NB = 8
HIDDEN = 32
PAD_EDGES = 16                     # padded GRU edge-updates per depth step
PAD_NODES = 8                      # padded root count for aggregation
NEI_FLAT = MAX_NB * PAD_EDGES      # 128 gathered neighbour rows per step
ROOT_FLAT = MAX_NB * PAD_NODES     # 64 gathered neighbour rows for roots


# ------------------------------ fused kernel --------------------------------

def jtnn_fused_kernel(cur_x_ref, nei_idx_ref, root_x_ref, root_nei_ref,
                      w1_ref, b1_ref, urw_ref, urb_ref, wh_ref, bh_ref,
                      wagg_ref, bagg_ref, out_ref, msg_ref):
    H = HIDDEN
    t = pl.program_id(0)
    table_rows = msg_ref.shape[0]              # max_depth * PAD_EDGES (static)

    @pl.when(t == 0)
    def _():
        msg_ref[...] = jnp.zeros_like(msg_ref)

    x = cur_x_ref[0]                           # [PAD_EDGES, H]
    idx = nei_idx_ref[0]                       # [NEI_FLAT, 1] int32 (pad = -1)
    msg = msg_ref[...]                         # [table_rows, H]

    # Gather incoming messages with a one-hot matmul; index -1 matches no
    # column -> zero row (reference's zero padding).
    onehot = (idx == jax.lax.broadcasted_iota(
        jnp.int32, (NEI_FLAT, table_rows), 1)).astype(jnp.float32)
    h_nei_flat = jnp.dot(onehot, msg, preferred_element_type=jnp.float32)  # [128, H]
    h_nei = h_nei_flat.reshape(MAX_NB, PAD_EDGES, H)    # neighbour-major
    sum_h = jnp.sum(h_nei, axis=0)                      # [PAD_EDGES, H]

    # Merged z-gate / r1 matmul:
    #   [x | sum_h] @ [[Wz_x, Wr], [Wz_h, 0]] + [bz | 0] = [z_pre | W_r(x)]
    xs = jnp.concatenate([x, sum_h], axis=1)            # [PAD_EDGES, 2H]
    zr = jnp.dot(xs, w1_ref[...], preferred_element_type=jnp.float32) + b1_ref[...]
    z = jax.nn.sigmoid(zr[:, :H])
    r1 = zr[:, H:]                                      # W_r(x), no bias

    # One batched U_r matmul over all MAX_NB*PAD_EDGES neighbour rows.
    r2 = (jnp.dot(h_nei_flat, urw_ref[...], preferred_element_type=jnp.float32)
          + urb_ref[...])                               # [128, H]
    r = jax.nn.sigmoid(r1[None, :, :] + r2.reshape(MAX_NB, PAD_EDGES, H))
    sum_gated = jnp.sum(r * h_nei, axis=0)              # [PAD_EDGES, H]

    xg = jnp.concatenate([x, sum_gated], axis=1)
    pre_h = jnp.tanh(jnp.dot(xg, wh_ref[...], preferred_element_type=jnp.float32)
                     + bh_ref[...])
    new_h = (1.0 - z) * sum_h + z * pre_h               # [PAD_EDGES, H]

    # Scatter this step's messages into the resident table (rows t*PE..).
    start = pl.multiple_of(t * PAD_EDGES, PAD_EDGES)
    msg_ref[pl.ds(start, PAD_EDGES), :] = new_h

    # Root aggregation on the (partially filled) table; the value written at
    # the final grid step (complete table) is the one that lands in HBM.
    msg_full = msg_ref[...]
    ridx = root_nei_ref[...]                            # [ROOT_FLAT, 1] int32
    r_onehot = (ridx == jax.lax.broadcasted_iota(
        jnp.int32, (ROOT_FLAT, table_rows), 1)).astype(jnp.float32)
    r_h_nei = jnp.dot(r_onehot, msg_full, preferred_element_type=jnp.float32)
    r_sum_h = jnp.sum(r_h_nei.reshape(MAX_NB, PAD_NODES, H), axis=0)
    xr = jnp.concatenate([root_x_ref[...], r_sum_h], axis=1)   # [PAD_NODES, 2H]
    out_ref[...] = jnp.maximum(
        jnp.dot(xr, wagg_ref[...], preferred_element_type=jnp.float32)
        + bagg_ref[...], 0.0)


@jax.jit
def jtnn_fused_forward(cur_x, nei_idx, root_x, root_nei,
                       w1, b1, urw, urb, wh, bh, wagg, bagg):
    max_depth, _, H = cur_x.shape
    table_rows = max_depth * PAD_EDGES
    step3 = lambda t: (t, 0, 0)       # per-step blocks
    const2 = lambda t: (0, 0)         # resident (fetched once) blocks

    grid_spec = pltpu.PrefetchScalarGridSpec(
        num_scalar_prefetch=0,
        grid=(max_depth,),
        in_specs=[
            pl.BlockSpec((1, PAD_EDGES, H), step3),    # cur_x per step
            pl.BlockSpec((1, NEI_FLAT, 1), step3),     # neighbour index table
            pl.BlockSpec((PAD_NODES, H), const2),      # root embeddings
            pl.BlockSpec((ROOT_FLAT, 1), const2),      # root neighbour indices
            pl.BlockSpec((2 * H, 2 * H), const2),      # merged Wz|Wr
            pl.BlockSpec((1, 2 * H), const2),          # merged bz|0
            pl.BlockSpec((H, H), const2),              # U_r weight
            pl.BlockSpec((1, H), const2),              # U_r bias
            pl.BlockSpec((2 * H, H), const2),          # W_h
            pl.BlockSpec((1, H), const2),              # b_h
            pl.BlockSpec((2 * H, H), const2),          # W (aggregate)
            pl.BlockSpec((1, H), const2),              # b (aggregate)
        ],
        out_specs=pl.BlockSpec((PAD_NODES, H), const2),
        scratch_shapes=[pltpu.VMEM((table_rows, H), jnp.float32)],
    )
    return pl.pallas_call(
        jtnn_fused_kernel,
        out_shape=jax.ShapeDtypeStruct((PAD_NODES, H), jnp.float32),
        grid_spec=grid_spec,
        compiler_params=pltpu.CompilerParams(
            dimension_semantics=("arbitrary",)),
    )(cur_x, nei_idx, root_x, root_nei, w1, b1, urw, urb, wh, bh, wagg, bagg)


# --------------------------- Python tree glue (exact) ------------------------

class MolTreeNode:
    def __init__(self, smiles):
        self.smiles = smiles
        self.neighbors = []


class MolTree:
    def __init__(self, smiles_list, edges):
        self.nodes = [MolTreeNode(s) for s in smiles_list]
        for a, b in edges:
            self.nodes[a].neighbors.append(self.nodes[b])
            self.nodes[b].neighbors.append(self.nodes[a])


class Vocab:
    def __init__(self, smiles_list):
        self._list = list(smiles_list)
        self._map = {s: i for i, s in enumerate(self._list)}

    def get_index(self, s):
        return self._map[s]

    def size(self):
        return len(self._list)


def set_batch_nodeID(mol_batch, vocab):
    tot = 0
    for mt in mol_batch:
        for node in mt.nodes:
            node.idx = tot
            node.wid = vocab.get_index(node.smiles)
            tot += 1


def get_prop_order(root):
    # TODO(synk): BFS over a Python object graph has no Pallas equivalent; it
    # stays host-side glue exactly as in the reference implementation.
    queue = deque([root])
    visited = set([root.idx])
    root.depth = 0
    order1, order2 = [], []
    while queue:
        x = queue.popleft()
        for y in x.neighbors:
            if y.idx not in visited:
                queue.append(y)
                visited.add(y.idx)
                y.depth = x.depth + 1
                if y.depth > len(order1):
                    order1.append([])
                    order2.append([])
                order1[y.depth - 1].append((x, y))
                order2[y.depth - 1].append((y, x))
    return order2[::-1] + order1


# ------------------------------- JTNNEncoder ---------------------------------

class JTNNEncoder:
    def __init__(self, vocab, hidden_size, key):
        self.vocab = vocab
        self.hidden_size = hidden_size
        H = hidden_size
        ks = jax.random.split(key, 10)
        s = 0.1
        self.embedding = s * jax.random.normal(ks[0], (vocab.size(), H), jnp.float32)
        # Linear weights stored as [in, out] (math: y = x @ W + b).
        self.Wz = s * jax.random.normal(ks[1], (2 * H, H), jnp.float32)
        self.bz = s * jax.random.normal(ks[2], (1, H), jnp.float32)
        self.Wr = s * jax.random.normal(ks[3], (H, H), jnp.float32)      # no bias
        self.Ur_w = s * jax.random.normal(ks[4], (H, H), jnp.float32)
        self.Ur_b = s * jax.random.normal(ks[5], (1, H), jnp.float32)
        self.Wh = s * jax.random.normal(ks[6], (2 * H, H), jnp.float32)
        self.bh = s * jax.random.normal(ks[7], (1, H), jnp.float32)
        self.W = s * jax.random.normal(ks[8], (2 * H, H), jnp.float32)
        self.bW = s * jax.random.normal(ks[9], (1, H), jnp.float32)
        # Merged gate weights for the fused kernel:
        #   [x | sum_h] @ W1 + b1 == [ W_z([x, sum_h]) | W_r(x) ]
        self.W1 = jnp.concatenate(
            [self.Wz,
             jnp.concatenate([self.Wr, jnp.zeros((H, H), jnp.float32)], axis=0)],
            axis=1)                                                       # [2H, 2H]
        self.b1 = jnp.concatenate([self.bz, jnp.zeros((1, H), jnp.float32)], axis=1)

    # ---- host-side preprocessing: edge schedule + neighbour index tables ----
    def _build_batch_tables(self, moltree_batch):
        set_batch_nodeID(moltree_batch, self.vocab)
        root_batch = [mt.nodes[0] for mt in moltree_batch]
        orders = [get_prop_order(r) for r in root_batch]
        max_depth = max(len(o) for o in orders)

        prop_lists = []
        edge2tid = {}                       # (src_idx, dst_idx) -> table row
        for t in range(max_depth):
            step_edges = []
            for order in orders:
                if t < len(order):
                    step_edges.extend(order[t])
            assert 0 < len(step_edges) <= PAD_EDGES
            for i, (nx, ny) in enumerate(step_edges):
                edge2tid[(nx.idx, ny.idx)] = t * PAD_EDGES + i
            prop_lists.append(step_edges)

        cur_wid = np.zeros((max_depth, PAD_EDGES), np.int32)
        nei_idx = np.full((max_depth, NEI_FLAT, 1), -1, np.int32)
        for t, step_edges in enumerate(prop_lists):
            for i, (nx, ny) in enumerate(step_edges):
                cur_wid[t, i] = nx.wid
                nbrs = [nz for nz in nx.neighbors if nz.idx != ny.idx]
                assert len(nbrs) <= MAX_NB, "node degree exceeds MAX_NB"
                for m, nz in enumerate(nbrs):
                    tid = edge2tid[(nz.idx, nx.idx)]
                    assert tid < t * PAD_EDGES, "message dependency not yet computed"
                    nei_idx[t, m * PAD_EDGES + i, 0] = tid

        n_roots = len(root_batch)
        assert 0 < n_roots <= PAD_NODES
        root_wid = np.zeros((PAD_NODES,), np.int32)
        root_nei = np.full((ROOT_FLAT, 1), -1, np.int32)
        for r, nx in enumerate(root_batch):
            root_wid[r] = nx.wid
            assert len(nx.neighbors) <= MAX_NB, "root degree exceeds MAX_NB"
            for m, ny in enumerate(nx.neighbors):
                root_nei[m * PAD_NODES + r, 0] = edge2tid[(ny.idx, nx.idx)]

        return max_depth, cur_wid, nei_idx, root_wid, root_nei, n_roots

    def forward(self, moltree_batch):
        (_, cur_wid, nei_idx, root_wid, root_nei, n_roots) = \
            self._build_batch_tables(moltree_batch)
        cur_x = jnp.take(self.embedding, jnp.asarray(cur_wid), axis=0)   # [D,PE,H]
        root_x = jnp.take(self.embedding, jnp.asarray(root_wid), axis=0)  # [PN,H]
        root_vecs = jtnn_fused_forward(
            cur_x, jnp.asarray(nei_idx), root_x, jnp.asarray(root_nei),
            self.W1, self.b1, self.Ur_w, self.Ur_b, self.Wh, self.bh,
            self.W, self.bW)
        return root_vecs[:n_roots]


# ----------------------- pure numpy reference (checks) -----------------------

def _reference_forward(enc, moltree_batch):
    H = enc.hidden_size
    set_batch_nodeID(moltree_batch, enc.vocab)
    root_batch = [mt.nodes[0] for mt in moltree_batch]
    orders = [get_prop_order(r) for r in root_batch]
    emb = np.asarray(enc.embedding)
    Wz, bz = np.asarray(enc.Wz), np.asarray(enc.bz)[0]
    Wr = np.asarray(enc.Wr)
    Urw, Urb = np.asarray(enc.Ur_w), np.asarray(enc.Ur_b)[0]
    Wh, bh = np.asarray(enc.Wh), np.asarray(enc.bh)[0]
    W, bW = np.asarray(enc.W), np.asarray(enc.bW)[0]
    sig = lambda v: 1.0 / (1.0 + np.exp(-v))
    h = {}
    pad = np.zeros((H,), np.float32)
    max_depth = max(len(o) for o in orders)
    for t in range(max_depth):
        prop_list = []
        for order in orders:
            if t < len(order):
                prop_list.extend(order[t])
        for nx, ny in prop_list:
            x = emb[nx.wid]
            nei = [h[(nz.idx, nx.idx)] for nz in nx.neighbors if nz.idx != ny.idx]
            nei = nei + [pad] * (MAX_NB - len(nei))
            hn = np.stack(nei, 0)
            sum_h = hn.sum(0)
            z = sig(np.concatenate([x, sum_h]) @ Wz + bz)
            r = sig((x @ Wr)[None, :] + hn @ Urw + Urb)
            sum_g = (r * hn).sum(0)
            pre_h = np.tanh(np.concatenate([x, sum_g]) @ Wh + bh)
            h[(nx.idx, ny.idx)] = (1.0 - z) * sum_h + z * pre_h
    outs = []
    for nx in root_batch:
        nei = [h[(ny.idx, nx.idx)] for ny in nx.neighbors]
        nei = nei + [pad] * (MAX_NB - len(nei))
        sum_h = np.stack(nei, 0).sum(0)
        outs.append(np.maximum(np.concatenate([emb[nx.wid], sum_h]) @ W + bW, 0.0))
    return np.stack(outs, 0)


# ----------------------------------- main ------------------------------------

if __name__ == "__main__":
    key = jax.random.PRNGKey(0)
    vocab = Vocab([f"s{i}" for i in range(16)])

    # two small synthetic junction trees (node 0 is the root of each)
    tree_a = MolTree(["s0", "s3", "s5", "s7", "s9"],
                     [(0, 1), (1, 2), (1, 3), (0, 4)])
    tree_b = MolTree(["s2", "s4", "s6", "s8"],
                     [(0, 1), (0, 2), (2, 3)])

    enc = JTNNEncoder(vocab, HIDDEN, key)
    batch = [tree_a, tree_b]
    root_vecs = jax.block_until_ready(enc.forward(batch))

    assert root_vecs.shape == (2, HIDDEN)
    assert bool(jnp.all(jnp.isfinite(root_vecs)))

    ref = _reference_forward(enc, batch)
    assert np.allclose(np.asarray(root_vecs), ref, rtol=2e-2, atol=2e-2), \
        float(np.abs(np.asarray(root_vecs) - ref).max())
    print("KERNEL_OK")
</pallas_src>

<mosaic_0001>
module attributes {stable_mosaic.version = 11 : i64} {
  func.func @jtnn_fused_kernel(%arg0: i32, %arg1: memref<1x16x32xf32, #tpu.memory_space<vmem>>, %arg2: memref<1x128x1xi32, #tpu.memory_space<vmem>>, %arg3: memref<8x32xf32, #tpu.memory_space<vmem>>, %arg4: memref<64x1xi32, #tpu.memory_space<vmem>>, %arg5: memref<64x64xf32, #tpu.memory_space<vmem>>, %arg6: memref<1x64xf32, #tpu.memory_space<vmem>>, %arg7: memref<32x32xf32, #tpu.memory_space<vmem>>, %arg8: memref<1x32xf32, #tpu.memory_space<vmem>>, %arg9: memref<64x32xf32, #tpu.memory_space<vmem>>, %arg10: memref<1x32xf32, #tpu.memory_space<vmem>>, %arg11: memref<64x32xf32, #tpu.memory_space<vmem>>, %arg12: memref<1x32xf32, #tpu.memory_space<vmem>>, %arg13: memref<8x32xf32, #tpu.memory_space<vmem>>, %arg14: memref<64x32xf32, #tpu.memory_space<vmem>>) attributes {dimension_semantics = [#tpu.dimension_semantics<arbitrary>], iteration_bounds = array<i64: 4>, scalar_prefetch = 0 : i64, scratch_operands = 1 : i64, tpu.core_type = #tpu.core_type<tc>, window_params = [{transform_indices = @transform_0, window_bounds = array<i64: 1, 16, 32>}, {transform_indices = @transform_1, window_bounds = array<i64: 1, 128, 1>}, {pipeline_mode = #tpu.pipeline_mode<synchronous>, transform_indices = @transform_2, window_bounds = array<i64: 8, 32>}, {pipeline_mode = #tpu.pipeline_mode<synchronous>, transform_indices = @transform_3, window_bounds = array<i64: 64, 1>}, {pipeline_mode = #tpu.pipeline_mode<synchronous>, transform_indices = @transform_4, window_bounds = array<i64: 64, 64>}, {pipeline_mode = #tpu.pipeline_mode<synchronous>, transform_indices = @transform_5, window_bounds = array<i64: 1, 64>}, {pipeline_mode = #tpu.pipeline_mode<synchronous>, transform_indices = @transform_6, window_bounds = array<i64: 32, 32>}, {pipeline_mode = #tpu.pipeline_mode<synchronous>, transform_indices = @transform_7, window_bounds = array<i64: 1, 32>}, {pipeline_mode = #tpu.pipeline_mode<synchronous>, transform_indices = @transform_8, window_bounds = array<i64: 64, 32>}, {pipeline_mode = #tpu.pipeline_mode<synchronous>, transform_indices = @transform_9, window_bounds = array<i64: 1, 32>}, {pipeline_mode = #tpu.pipeline_mode<synchronous>, transform_indices = @transform_10, window_bounds = array<i64: 64, 32>}, {pipeline_mode = #tpu.pipeline_mode<synchronous>, transform_indices = @transform_11, window_bounds = array<i64: 1, 32>}, {pipeline_mode = #tpu.pipeline_mode<synchronous>, transform_indices = @transform_12, window_bounds = array<i64: 8, 32>}]} {
    %c0_i32 = arith.constant 0 : i32
    %0 = arith.cmpi eq, %arg0, %c0_i32 : i32
    %1 = arith.extui %0 : i1 to i32
    %c0_i32_0 = arith.constant 0 : i32
    %2 = arith.cmpi ne, %1, %c0_i32_0 : i32
    scf.if %2 {
      %cst_45 = arith.constant 0.000000e+00 : f32
      %81 = vector.broadcast %cst_45 : f32 to vector<64x32xf32>
      %c0_46 = arith.constant 0 : index
      %c0_47 = arith.constant 0 : index
      %82 = vector.load %arg14[%c0_46, %c0_47] : memref<64x32xf32, #tpu.memory_space<vmem>>, vector<64x32xf32>
      tpu.vector_store %arg14[%c0_46, %c0_47], %81 {strides = array<i32>} : memref<64x32xf32, #tpu.memory_space<vmem>>, vector<64x32xf32>,
    } else {
    }
    %c0 = arith.constant 0 : index
    %c0_1 = arith.constant 0 : index
    %c0_2 = arith.constant 0 : index
    %3 = vector.load %arg1[%c0, %c0_1, %c0_2] : memref<1x16x32xf32, #tpu.memory_space<vmem>>, vector<1x16x32xf32>
    %4 = vector.shape_cast %3 : vector<1x16x32xf32> to vector<16x32xf32>
    %c0_3 = arith.constant 0 : index
    %c0_4 = arith.constant 0 : index
    %c0_5 = arith.constant 0 : index
    %5 = vector.load %arg2[%c0_3, %c0_4, %c0_5] : memref<1x128x1xi32, #tpu.memory_space<vmem>>, vector<1x128x1xi32>
    %6 = vector.shape_cast %5 : vector<1x128x1xi32> to vector<128x1xi32>
    %c0_6 = arith.constant 0 : index
    %c0_7 = arith.constant 0 : index
    %7 = vector.load %arg14[%c0_6, %c0_7] : memref<64x32xf32, #tpu.memory_space<vmem>>, vector<64x32xf32>
    %8 = tpu.iota {dimensions = array<i32: 1>} : vector<128x64xi32>
    %9 = vector.broadcast %6 : vector<128x1xi32> to vector<128x64xi32>
    %10 = arith.cmpi eq, %9, %8 : vector<128x64xi32>
    %11 = arith.extui %10 : vector<128x64xi1> to vector<128x64xi32>
    %12 = arith.sitofp %11 : vector<128x64xi32> to vector<128x64xf32>
    %cst = arith.constant dense<0.000000e+00> : vector<128x32xf32>
    %13 = tpu.matmul %12, %7, %cst {dimension_numbers = #tpu.dot_dimension_numbers<[1], [0], [0], [1], [0, 0, 1, 1], [], []>} : vector<128x64xf32>, vector<64x32xf32>, vector<128x32xf32> -> vector<128x32xf32>
    %14 = vector.shape_cast %13 : vector<128x32xf32> to vector<8x16x32xf32>
    %cst_8 = arith.constant dense<0.000000e+00> : vector<16x32xf32>
    %15 = vector.multi_reduction <add>, %14, %cst_8 [0] : vector<8x16x32xf32> to vector<16x32xf32>
    %16 = tpu.concatenate %4, %15 in 1 : vector<16x32xf32>, vector<16x32xf32> -> vector<16x64xf32>
    %c0_9 = arith.constant 0 : index
    %c0_10 = arith.constant 0 : index
    %17 = vector.load %arg5[%c0_9, %c0_10] : memref<64x64xf32, #tpu.memory_space<vmem>>, vector<64x64xf32>
    %cst_11 = arith.constant dense<0.000000e+00> : vector<16x64xf32>
    %18 = tpu.matmul %16, %17, %cst_11 {dimension_numbers = #tpu.dot_dimension_numbers<[1], [0], [0], [1], [0, 0, 1, 1], [], []>} : vector<16x64xf32>, vector<64x64xf32>, vector<16x64xf32> -> vector<16x64xf32>
    %c0_12 = arith.constant 0 : index
    %c0_13 = arith.constant 0 : index
    %19 = vector.load %arg6[%c0_12, %c0_13] : memref<1x64xf32, #tpu.memory_space<vmem>>, vector<1x64xf32>
    %20 = vector.broadcast %19 : vector<1x64xf32> to vector<16x64xf32>
    %21 = arith.addf %18, %20 : vector<16x64xf32>
    %22 = vector.extract_strided_slice %21 {offsets = [0, 0], sizes = [16, 32], strides = [1, 1]} : vector<16x64xf32> to vector<16x32xf32>
    %23 = arith.negf %22 : vector<16x32xf32>
    %24 = math.exp %23 : vector<16x32xf32>
    %cst_14 = arith.constant 1.000000e+00 : f32
    %25 = vector.broadcast %cst_14 : f32 to vector<16x32xf32>
    %26 = arith.addf %25, %24 : vector<16x32xf32>
    %27 = arith.divf %25, %26 : vector<16x32xf32>
    %28 = vector.extract_strided_slice %21 {offsets = [0, 32], sizes = [16, 32], strides = [1, 1]} : vector<16x64xf32> to vector<16x32xf32>
    %c0_15 = arith.constant 0 : index
    %c0_16 = arith.constant 0 : index
    %29 = vector.load %arg7[%c0_15, %c0_16] : memref<32x32xf32, #tpu.memory_space<vmem>>, vector<32x32xf32>
    %cst_17 = arith.constant dense<0.000000e+00> : vector<128x32xf32>
    %30 = tpu.matmul %13, %29, %cst_17 {dimension_numbers = #tpu.dot_dimension_numbers<[1], [0], [0], [1], [0, 0, 1, 1], [], []>} : vector<128x32xf32>, vector<32x32xf32>, vector<128x32xf32> -> vector<128x32xf32>
    %c0_18 = arith.constant 0 : index
    %c0_19 = arith.constant 0 : index
    %31 = vector.load %arg8[%c0_18, %c0_19] : memref<1x32xf32, #tpu.memory_space<vmem>>, vector<1x32xf32>
    %32 = vector.broadcast %31 : vector<1x32xf32> to vector<128x32xf32>
    %33 = arith.addf %30, %32 : vector<128x32xf32>
    %34 = vector.shape_cast %28 : vector<16x32xf32> to vector<1x16x32xf32>
    %35 = vector.shape_cast %33 : vector<128x32xf32> to vector<8x16x32xf32>
    %36 = vector.broadcast %34 : vector<1x16x32xf32> to vector<8x16x32xf32>
    %37 = arith.addf %36, %35 : vector<8x16x32xf32>
    %38 = arith.negf %37 : vector<8x16x32xf32>
    %39 = math.exp %38 : vector<8x16x32xf32>
    %cst_20 = arith.constant 1.000000e+00 : f32
    %40 = vector.broadcast %cst_20 : f32 to vector<8x16x32xf32>
    %41 = arith.addf %40, %39 : vector<8x16x32xf32>
    %42 = arith.divf %40, %41 : vector<8x16x32xf32>
    %43 = arith.mulf %42, %14 : vector<8x16x32xf32>
    %cst_21 = arith.constant dense<0.000000e+00> : vector<16x32xf32>
    %44 = vector.multi_reduction <add>, %43, %cst_21 [0] : vector<8x16x32xf32> to vector<16x32xf32>
    %45 = tpu.concatenate %4, %44 in 1 : vector<16x32xf32>, vector<16x32xf32> -> vector<16x64xf32>
    %c0_22 = arith.constant 0 : index
    %c0_23 = arith.constant 0 : index
    %46 = vector.load %arg9[%c0_22, %c0_23] : memref<64x32xf32, #tpu.memory_space<vmem>>, vector<64x32xf32>
    %cst_24 = arith.constant dense<0.000000e+00> : vector<16x32xf32>
    %47 = tpu.matmul %45, %46, %cst_24 {dimension_numbers = #tpu.dot_dimension_numbers<[1], [0], [0], [1], [0, 0, 1, 1], [], []>} : vector<16x64xf32>, vector<64x32xf32>, vector<16x32xf32> -> vector<16x32xf32>
    %c0_25 = arith.constant 0 : index
    %c0_26 = arith.constant 0 : index
    %48 = vector.load %arg10[%c0_25, %c0_26] : memref<1x32xf32, #tpu.memory_space<vmem>>, vector<1x32xf32>
    %49 = vector.broadcast %48 : vector<1x32xf32> to vector<16x32xf32>
    %50 = arith.addf %47, %49 : vector<16x32xf32>
    %51 = math.tanh %50 : vector<16x32xf32>
    %cst_27 = arith.constant 1.000000e+00 : f32
    %52 = vector.broadcast %cst_27 : f32 to vector<16x32xf32>
    %53 = arith.subf %52, %27 : vector<16x32xf32>
    %54 = arith.mulf %53, %15 : vector<16x32xf32>
    %55 = arith.mulf %27, %51 : vector<16x32xf32>
    %56 = arith.addf %54, %55 : vector<16x32xf32>
    %c16_i32 = arith.constant 16 : i32
    %57 = arith.muli %arg0, %c16_i32 : i32
    %58 = tpu.assume_multiple %57, 16 : i32
    %59 = arith.index_cast %58 : i32 to index
    %c0_28 = arith.constant 0 : index
    %60 = vector.load %arg14[%59, %c0_28] : memref<64x32xf32, #tpu.memory_space<vmem>>, vector<16x32xf32>
    tpu.vector_store %arg14[%59, %c0_28], %56 {strides = array<i32>} : memref<64x32xf32, #tpu.memory_space<vmem>>, vector<16x32xf32>,
    %c0_29 = arith.constant 0 : index
    %c0_30 = arith.constant 0 : index
    %61 = vector.load %arg14[%c0_29, %c0_30] : memref<64x32xf32, #tpu.memory_space<vmem>>, vector<64x32xf32>
    %c0_31 = arith.constant 0 : index
    %c0_32 = arith.constant 0 : index
    %62 = vector.load %arg4[%c0_31, %c0_32] : memref<64x1xi32, #tpu.memory_space<vmem>>, vector<64x1xi32>
    %63 = tpu.iota {dimensions = array<i32: 1>} : vector<64x64xi32>
    %64 = vector.broadcast %62 : vector<64x1xi32> to vector<64x64xi32>
    %65 = arith.cmpi eq, %64, %63 : vector<64x64xi32>
    %66 = arith.extui %65 : vector<64x64xi1> to vector<64x64xi32>
    %67 = arith.sitofp %66 : vector<64x64xi32> to vector<64x64xf32>
    %cst_33 = arith.constant dense<0.000000e+00> : vector<64x32xf32>
    %68 = tpu.matmul %67, %61, %cst_33 {dimension_numbers = #tpu.dot_dimension_numbers<[1], [0], [0], [1], [0, 0, 1, 1], [], []>} : vector<64x64xf32>, vector<64x32xf32>, vector<64x32xf32> -> vector<64x32xf32>
    %69 = vector.shape_cast %68 : vector<64x32xf32> to vector<8x8x32xf32>
    %cst_34 = arith.constant dense<0.000000e+00> : vector<8x32xf32>
    %70 = vector.multi_reduction <add>, %69, %cst_34 [0] : vector<8x8x32xf32> to vector<8x32xf32>
    %c0_35 = arith.constant 0 : index
    %c0_36 = arith.constant 0 : index
    %71 = vector.load %arg3[%c0_35, %c0_36] : memref<8x32xf32, #tpu.memory_space<vmem>>, vector<8x32xf32>
    %72 = tpu.concatenate %71, %70 in 1 : vector<8x32xf32>, vector<8x32xf32> -> vector<8x64xf32>
    %c0_37 = arith.constant 0 : index
    %c0_38 = arith.constant 0 : index
    %73 = vector.load %arg11[%c0_37, %c0_38] : memref<64x32xf32, #tpu.memory_space<vmem>>, vector<64x32xf32>
    %cst_39 = arith.constant dense<0.000000e+00> : vector<8x32xf32>
    %74 = tpu.matmul %72, %73, %cst_39 {dimension_numbers = #tpu.dot_dimension_numbers<[1], [0], [0], [1], [0, 0, 1, 1], [], []>} : vector<8x64xf32>, vector<64x32xf32>, vector<8x32xf32> -> vector<8x32xf32>
    %c0_40 = arith.constant 0 : index
    %c0_41 = arith.constant 0 : index
    %75 = vector.load %arg12[%c0_40, %c0_41] : memref<1x32xf32, #tpu.memory_space<vmem>>, vector<1x32xf32>
    %76 = vector.broadcast %75 : vector<1x32xf32> to vector<8x32xf32>
    %77 = arith.addf %74, %76 : vector<8x32xf32>
    %cst_42 = arith.constant 0.000000e+00 : f32
    %78 = vector.broadcast %cst_42 : f32 to vector<8x32xf32>
    %79 = arith.maximumf %77, %78 : vector<8x32xf32>
    %c0_43 = arith.constant 0 : index
    %c0_44 = arith.constant 0 : index
    %80 = vector.load %arg13[%c0_43, %c0_44] : memref<8x32xf32, #tpu.memory_space<vmem>>, vector<8x32xf32>
    tpu.vector_store %arg13[%c0_43, %c0_44], %79 {strides = array<i32>} : memref<8x32xf32, #tpu.memory_space<vmem>>, vector<8x32xf32>,
    return
  }
  func.func @transform_0(%arg0: i32) -> (i32, i32, i32) {
    %c0_i32 = arith.constant 0 : i32
    %c0_i32_0 = arith.constant 0 : i32
    %c0_i32_1 = arith.constant 0 : i32
    return %arg0, %c0_i32, %c0_i32_0 : i32, i32, i32
  }
  func.func @transform_1(%arg0: i32) -> (i32, i32, i32) {
    %c0_i32 = arith.constant 0 : i32
    %c0_i32_0 = arith.constant 0 : i32
    %c0_i32_1 = arith.constant 0 : i32
    return %arg0, %c0_i32, %c0_i32_0 : i32, i32, i32
  }
  func.func @transform_2(%arg0: i32) -> (i32, i32) {
    %c0_i32 = arith.constant 0 : i32
    %c0_i32_0 = arith.constant 0 : i32
    %c0_i32_1 = arith.constant 0 : i32
    return %c0_i32, %c0_i32_0 : i32, i32
  }
  func.func @transform_3(%arg0: i32) -> (i32, i32) {
    %c0_i32 = arith.constant 0 : i32
    %c0_i32_0 = arith.constant 0 : i32
    %c0_i32_1 = arith.constant 0 : i32
    return %c0_i32, %c0_i32_0 : i32, i32
  }
  func.func @transform_4(%arg0: i32) -> (i32, i32) {
    %c0_i32 = arith.constant 0 : i32
    %c0_i32_0 = arith.constant 0 : i32
    %c0_i32_1 = arith.constant 0 : i32
    return %c0_i32, %c0_i32_0 : i32, i32
  }
  func.func @transform_5(%arg0: i32) -> (i32, i32) {
    %c0_i32 = arith.constant 0 : i32
    %c0_i32_0 = arith.constant 0 : i32
    %c0_i32_1 = arith.constant 0 : i32
    return %c0_i32, %c0_i32_0 : i32, i32
  }
  func.func @transform_6(%arg0: i32) -> (i32, i32) {
    %c0_i32 = arith.constant 0 : i32
    %c0_i32_0 = arith.constant 0 : i32
    %c0_i32_1 = arith.constant 0 : i32
    return %c0_i32, %c0_i32_0 : i32, i32
  }
  func.func @transform_7(%arg0: i32) -> (i32, i32) {
    %c0_i32 = arith.constant 0 : i32
    %c0_i32_0 = arith.constant 0 : i32
    %c0_i32_1 = arith.constant 0 : i32
    return %c0_i32, %c0_i32_0 : i32, i32
  }
  func.func @transform_8(%arg0: i32) -> (i32, i32) {
    %c0_i32 = arith.constant 0 : i32
    %c0_i32_0 = arith.constant 0 : i32
    %c0_i32_1 = arith.constant 0 : i32
    return %c0_i32, %c0_i32_0 : i32, i32
  }
  func.func @transform_9(%arg0: i32) -> (i32, i32) {
    %c0_i32 = arith.constant 0 : i32
    %c0_i32_0 = arith.constant 0 : i32
    %c0_i32_1 = arith.constant 0 : i32
    return %c0_i32, %c0_i32_0 : i32, i32
  }
  func.func @transform_10(%arg0: i32) -> (i32, i32) {
    %c0_i32 = arith.constant 0 : i32
    %c0_i32_0 = arith.constant 0 : i32
    %c0_i32_1 = arith.constant 0 : i32
    return %c0_i32, %c0_i32_0 : i32, i32
  }
  func.func @transform_11(%arg0: i32) -> (i32, i32) {
    %c0_i32 = arith.constant 0 : i32
    %c0_i32_0 = arith.constant 0 : i32
    %c0_i32_1 = arith.constant 0 : i32
    return %c0_i32, %c0_i32_0 : i32, i32
  }
  func.func @transform_12(%arg0: i32) -> (i32, i32) {
    %c0_i32 = arith.constant 0 : i32
    %c0_i32_0 = arith.constant 0 : i32
    %c0_i32_1 = arith.constant 0 : i32
    return %c0_i32, %c0_i32_0 : i32, i32
  }
}

</mosaic_0001>

<llo_original>
// kernel: jtnn_fused_forward.1
$region0: #{jtnn_fused_forward.1}
  #allocation0 [shape = 'u32[]', space=smem, size = 0x4, offset = 0x4, fixed_abs, tag = 'smem constant byte address 0x4 - core index']
  #allocation1 [shape = 'u32[144,128]{1,0:T(1,128)}', space=vmem, size = 0x12000, scoped, tag = 'internal scratch']
  #allocation2 [shape = 'f32[64,32]{1,0:T(8,128)}', space=vmem, size = 0x8000, scoped, tag = 'scratch operand']
  %s0 = inlined_call_operand.vmem [shape: f32[4,16,32], index: 0, kind: input, shape index: {}]
  %s1 = inlined_call_operand.vmem [shape: s32[4,128,1], index: 1, kind: input, shape index: {}]
  %s2 = inlined_call_operand.vmem [shape: f32[8,32], index: 2, kind: input, shape index: {}]
  %s3 = inlined_call_operand.vmem [shape: s32[64,1], index: 3, kind: input, shape index: {}]
  %s4 = inlined_call_operand.vmem [shape: f32[64,64], index: 4, kind: input, shape index: {}]
  %s5 = inlined_call_operand.vmem [shape: f32[1,64], index: 5, kind: input, shape index: {}]
  %s6 = inlined_call_operand.vmem [shape: f32[32,32], index: 6, kind: input, shape index: {}]
  %s7 = inlined_call_operand.vmem [shape: f32[1,32], index: 7, kind: input, shape index: {}]
  %s8 = inlined_call_operand.vmem [shape: f32[64,32], index: 8, kind: input, shape index: {}]
  %s9 = inlined_call_operand.vmem [shape: f32[1,32], index: 9, kind: input, shape index: {}]
  %s10 = inlined_call_operand.vmem [shape: f32[64,32], index: 10, kind: input, shape index: {}]
  %s11 = inlined_call_operand.vmem [shape: f32[1,32], index: 11, kind: input, shape index: {}]
  %s12 = inlined_call_operand.hbm [shape: f32[8,32], index: 12, kind: output, shape index: {}]
  %s13 = sld [smem:[#allocation0]]
  $region85: #{jtnn_fused_forward.1} parent=0
    _
  %s15 = ssub.s32 1, %s13
  %s16 = scalar_select 0, %s15, %s13
  $region1: #{jtnn_fused_forward.1} parent=0
    #allocation3 [shape = 'u8[4096]{0}', space=vmem, size = 0x1000, scoped, tag = 'output window, operand 0, single buffered']
    #allocation4 [shape = 's32[2]{0}', space=sflag, size = 0x8, scoped, tag = 'scoped memory for jtnn_fused_forward.1']
    %17 = vsyncpa [#allocation4], 0
    loop: start=0, step=1, limit=6
    $region2: #{jtnn_fused_forward.1} parent=1 // loop_pre_header
      _
    $region3: #{jtnn_fused_forward.1} parent=1 // loop_header
      %s19 = sphi 0, %s23
      %p20 = scmp.ge.s32.totalorder %s19, 6
      %s29 = sphi 0, %s31
      %s32 = sphi 0, %s29
      %s33 = sphi 0, %s32
      %s49 = sphi 0, %s33
      %s55 = sphi 0, %s57
      %s58 = sphi 0, %s55
      %s59 = sphi 0, %s58
      %s75 = sphi 0, %s59
      %s79 = sphi 0, %s79
      %s81 = sphi 0, %s79
      %s82 = sphi 0, %s81
      %s96 = sphi 0, %s82
      %s100 = sphi 0, %s100
      %s102 = sphi 0, %s100
      %s103 = sphi 0, %s102
      %s117 = sphi 0, %s103
      %s121 = sphi 0, %s121
      %s123 = sphi 0, %s121
      %s124 = sphi 0, %s123
      %s138 = sphi 0, %s124
      %s142 = sphi 0, %s142
      %s144 = sphi 0, %s142
      %s145 = sphi 0, %s144
      %s159 = sphi 0, %s145
      %s163 = sphi 0, %s163
      %s165 = sphi 0, %s163
      %s166 = sphi 0, %s165
      %s180 = sphi 0, %s166
      %s184 = sphi 0, %s184
      %s186 = sphi 0, %s184
      %s187 = sphi 0, %s186
      %s201 = sphi 0, %s187
      %s205 = sphi 0, %s205
      %s207 = sphi 0, %s205
      %s208 = sphi 0, %s207
      %s222 = sphi 0, %s208
      %s226 = sphi 0, %s226
      %s228 = sphi 0, %s226
      %s229 = sphi 0, %s228
      %s243 = sphi 0, %s229
      %s247 = sphi 0, %s247
      %s249 = sphi 0, %s247
      %s250 = sphi 0, %s249
      %s264 = sphi 0, %s250
      %s268 = sphi 0, %s268
      %s270 = sphi 0, %s268
      %s271 = sphi 0, %s270
      %s285 = sphi 0, %s271
      %s289 = sphi 0, %s289
      %s291 = sphi 0, %s289
      %s292 = sphi 0, %s291
      %s306 = sphi 0, %s292
    $region4: #{jtnn_fused_forward.1} parent=1 // loop_header_branch
      %22 = sbr.rel (%p20) target = $region8
    $region5: #{jtnn_fused_forward.1} parent=1 // loop_body
      %s24 = ssub.s32 %s19, 1
      %s25 = ssub.s32 %s19, 2
      %s26 = sadd.s32 %s19, 1
      %s27 = ssub.s32 %s19, %s26
      %p28 = scmp.eq.s32.totalorder %s27, 0
      %s30 = sadd.s32 %s29, 1
      %s31 = scalar_select %p28, %s29, %s30
      %p34 = pneg %p28
      %p35 = scmp.eq.s32.totalorder %s19, 3
      %p36 = por %p34, %p35
      %p37 = scmp.ne.s32.totalorder %s29, %s32
      %p38 = scmp.eq.s32.totalorder %s19, 0
      %p39 = por %p37, %p38
      %p40 = scmp.ne.s32.totalorder %s29, %s32
      %p41 = scmp.eq.s32.totalorder %s24, 3
      %p42 = por %p40, %p41
      %p43 = scmp.ne.s32.totalorder %s32, %s33
      %p44 = scmp.eq.s32.totalorder %s24, 0
      %p45 = por %p43, %p44
      %p46 = scmp.ne.s32.totalorder %s32, %s33
      %p47 = scmp.eq.s32.totalorder %s25, 3
      %p48 = por %p46, %p47
      %p50 = scmp.ne.s32.totalorder %s33, %s49
      %p51 = scmp.eq.s32.totalorder %s25, 0
      %p52 = por %p50, %p51
      %s53 = ssub.s32 %s19, %s26
      %p54 = scmp.eq.s32.totalorder %s53, 0
      %s56 = sadd.s32 %s55, 1
      %s57 = scalar_select %p54, %s55, %s56
      %p60 = pneg %p54
      %p61 = scmp.eq.s32.totalorder %s19, 3
      %p62 = por %p60, %p61
      %p63 = scmp.ne.s32.totalorder %s55, %s58
      %p64 = scmp.eq.s32.totalorder %s19, 0
      %p65 = por %p63, %p64
      %p66 = scmp.ne.s32.totalorder %s55, %s58
      %p67 = scmp.eq.s32.totalorder %s24, 3
      %p68 = por %p66, %p67
      %p69 = scmp.ne.s32.totalorder %s58, %s59
      %p70 = scmp.eq.s32.totalorder %s24, 0
      %p71 = por %p69, %p70
      %p72 = scmp.ne.s32.totalorder %s58, %s59
      %p73 = scmp.eq.s32.totalorder %s25, 3
      %p74 = por %p72, %p73
      %p76 = scmp.ne.s32.totalorder %s59, %s75
      %p77 = scmp.eq.s32.totalorder %s25, 0
      %p78 = por %p76, %p77
      %s80 = sadd.s32 %s79, 1
      %p83 = scmp.eq.s32.totalorder %s19, 3
      %p84 = scmp.ne.s32.totalorder %s79, %s81
      %p85 = scmp.eq.s32.totalorder %s19, 0
      %p86 = por %p84, %p85
      %p87 = scmp.ne.s32.totalorder %s79, %s81
      %p88 = scmp.eq.s32.totalorder %s24, 3
      %p89 = por %p87, %p88
      %p90 = scmp.ne.s32.totalorder %s81, %s82
      %p91 = scmp.eq.s32.totalorder %s24, 0
      %p92 = por %p90, %p91
      %p93 = scmp.ne.s32.totalorder %s81, %s82
      %p94 = scmp.eq.s32.totalorder %s25, 3
      %p95 = por %p93, %p94
      %p97 = scmp.ne.s32.totalorder %s82, %s96
      %p98 = scmp.eq.s32.totalorder %s25, 0
      %p99 = por %p97, %p98
      %s101 = sadd.s32 %s100, 1
      %p104 = scmp.eq.s32.totalorder %s19, 3
      %p105 = scmp.ne.s32.totalorder %s100, %s102
      %p106 = scmp.eq.s32.totalorder %s19, 0
      %p107 = por %p105, %p106
      %p108 = scmp.ne.s32.totalorder %s100, %s102
      %p109 = scmp.eq.s32.totalorder %s24, 3
      %p110 = por %p108, %p109
      %p111 = scmp.ne.s32.totalorder %s102, %s103
      %p112 = scmp.eq.s32.totalorder %s24, 0
      %p113 = por %p111, %p112
      %p114 = scmp.ne.s32.totalorder %s102, %s103
      %p115 = scmp.eq.s32.totalorder %s25, 3
      %p116 = por %p114, %p115
      %p118 = scmp.ne.s32.totalorder %s103, %s117
      %p119 = scmp.eq.s32.totalorder %s25, 0
      %p120 = por %p118, %p119
      %s122 = sadd.s32 %s121, 1
      %p125 = scmp.eq.s32.totalorder %s19, 3
      %p126 = scmp.ne.s32.totalorder %s121, %s123
      %p127 = scmp.eq.s32.totalorder %s19, 0
      %p128 = por %p126, %p127
      %p129 = scmp.ne.s32.totalorder %s121, %s123
      %p130 = scmp.eq.s32.totalorder %s24, 3
      %p131 = por %p129, %p130
      %p132 = scmp.ne.s32.totalorder %s123, %s124
      %p133 = scmp.eq.s32.totalorder %s24, 0
      %p134 = por %p132, %p133
      %p135 = scmp.ne.s32.totalorder %s123, %s124
      %p136 = scmp.eq.s32.totalorder %s25, 3
      %p137 = por %p135, %p136
      %p139 = scmp.ne.s32.totalorder %s124, %s138
      %p140 = scmp.eq.s32.totalorder %s25, 0
      %p141 = por %p139, %p140
      %s143 = sadd.s32 %s142, 1
      %p146 = scmp.eq.s32.totalorder %s19, 3
      %p147 = scmp.ne.s32.totalorder %s142, %s144
      %p148 = scmp.eq.s32.totalorder %s19, 0
      %p149 = por %p147, %p148
      %p150 = scmp.ne.s32.totalorder %s142, %s144
      %p151 = scmp.eq.s32.totalorder %s24, 3
      %p152 = por %p150, %p151
      %p153 = scmp.ne.s32.totalorder %s144, %s145
      %p154 = scmp.eq.s32.totalorder %s24, 0
      %p155 = por %p153, %p154
      %p156 = scmp.ne.s32.totalorder %s144, %s145
      %p157 = scmp.eq.s32.totalorder %s25, 3
      %p158 = por %p156, %p157
      %p160 = scmp.ne.s32.totalorder %s145, %s159
      %p161 = scmp.eq.s32.totalorder %s25, 0
      %p162 = por %p160, %p161
      %s164 = sadd.s32 %s163, 1
      %p167 = scmp.eq.s32.totalorder %s19, 3
      %p168 = scmp.ne.s32.totalorder %s163, %s165
      %p169 = scmp.eq.s32.totalorder %s19, 0
      %p170 = por %p168, %p169
      %p171 = scmp.ne.s32.totalorder %s163, %s165
      %p172 = scmp.eq.s32.totalorder %s24, 3
      %p173 = por %p171, %p172
      %p174 = scmp.ne.s32.totalorder %s165, %s166
      %p175 = scmp.eq.s32.totalorder %s24, 0
      %p176 = por %p174, %p175
      %p177 = scmp.ne.s32.totalorder %s165, %s166
      %p178 = scmp.eq.s32.totalorder %s25, 3
      %p179 = por %p177, %p178
      %p181 = scmp.ne.s32.totalorder %s166, %s180
      %p182 = scmp.eq.s32.totalorder %s25, 0
      %p183 = por %p181, %p182
      %s185 = sadd.s32 %s184, 1
      %p188 = scmp.eq.s32.totalorder %s19, 3
      %p189 = scmp.ne.s32.totalorder %s184, %s186
      %p190 = scmp.eq.s32.totalorder %s19, 0
      %p191 = por %p189, %p190
      %p192 = scmp.ne.s32.totalorder %s184, %s186
      %p193 = scmp.eq.s32.totalorder %s24, 3
      %p194 = por %p192, %p193
      %p195 = scmp.ne.s32.totalorder %s186, %s187
      %p196 = scmp.eq.s32.totalorder %s24, 0
      %p197 = por %p195, %p196
      %p198 = scmp.ne.s32.totalorder %s186, %s187
      %p199 = scmp.eq.s32.totalorder %s25, 3
      %p200 = por %p198, %p199
      %p202 = scmp.ne.s32.totalorder %s187, %s201
      %p203 = scmp.eq.s32.totalorder %s25, 0
      %p204 = por %p202, %p203
      %s206 = sadd.s32 %s205, 1
      %p209 = scmp.eq.s32.totalorder %s19, 3
      %p210 = scmp.ne.s32.totalorder %s205, %s207
      %p211 = scmp.eq.s32.totalorder %s19, 0
      %p212 = por %p210, %p211
      %p213 = scmp.ne.s32.totalorder %s205, %s207
      %p214 = scmp.eq.s32.totalorder %s24, 3
      %p215 = por %p213, %p214
      %p216 = scmp.ne.s32.totalorder %s207, %s208
      %p217 = scmp.eq.s32.totalorder %s24, 0
      %p218 = por %p216, %p217
      %p219 = scmp.ne.s32.totalorder %s207, %s208
      %p220 = scmp.eq.s32.totalorder %s25, 3
      %p221 = por %p219, %p220
      %p223 = scmp.ne.s32.totalorder %s208, %s222
      %p224 = scmp.eq.s32.totalorder %s25, 0
      %p225 = por %p223, %p224
      %s227 = sadd.s32 %s226, 1
      %p230 = scmp.eq.s32.totalorder %s19, 3
      %p231 = scmp.ne.s32.totalorder %s226, %s228
      %p232 = scmp.eq.s32.totalorder %s19, 0
      %p233 = por %p231, %p232
      %p234 = scmp.ne.s32.totalorder %s226, %s228
      %p235 = scmp.eq.s32.totalorder %s24, 3
      %p236 = por %p234, %p235
      %p237 = scmp.ne.s32.totalorder %s228, %s229
      %p238 = scmp.eq.s32.totalorder %s24, 0
      %p239 = por %p237, %p238
      %p240 = scmp.ne.s32.totalorder %s228, %s229
      %p241 = scmp.eq.s32.totalorder %s25, 3
      %p242 = por %p240, %p241
      %p244 = scmp.ne.s32.totalorder %s229, %s243
      %p245 = scmp.eq.s32.totalorder %s25, 0
      %p246 = por %p244, %p245
      %s248 = sadd.s32 %s247, 1
      %p251 = scmp.eq.s32.totalorder %s19, 3
      %p252 = scmp.ne.s32.totalorder %s247, %s249
      %p253 = scmp.eq.s32.totalorder %s19, 0
      %p254 = por %p252, %p253
      %p255 = scmp.ne.s32.totalorder %s247, %s249
      %p256 = scmp.eq.s32.totalorder %s24, 3
      %p257 = por %p255, %p256
      %p258 = scmp.ne.s32.totalorder %s249, %s250
      %p259 = scmp.eq.s32.totalorder %s24, 0
      %p260 = por %p258, %p259
      %p261 = scmp.ne.s32.totalorder %s249, %s250
      %p262 = scmp.eq.s32.totalorder %s25, 3
      %p263 = por %p261, %p262
      %p265 = scmp.ne.s32.totalorder %s250, %s264
      %p266 = scmp.eq.s32.totalorder %s25, 0
      %p267 = por %p265, %p266
      %s269 = sadd.s32 %s268, 1
      %p272 = scmp.eq.s32.totalorder %s19, 3
      %p273 = scmp.ne.s32.totalorder %s268, %s270
      %p274 = scmp.eq.s32.totalorder %s19, 0
      %p275 = por %p273, %p274
      %p276 = scmp.ne.s32.totalorder %s268, %s270
      %p277 = scmp.eq.s32.totalorder %s24, 3
      %p278 = por %p276, %p277
      %p279 = scmp.ne.s32.totalorder %s270, %s271
      %p280 = scmp.eq.s32.totalorder %s24, 0
      %p281 = por %p279, %p280
      %p282 = scmp.ne.s32.totalorder %s270, %s271
      %p283 = scmp.eq.s32.totalorder %s25, 3
      %p284 = por %p282, %p283
      %p286 = scmp.ne.s32.totalorder %s271, %s285
      %p287 = scmp.eq.s32.totalorder %s25, 0
      %p288 = por %p286, %p287
      %s290 = sadd.s32 %s289, 1
      %p293 = scmp.eq.s32.totalorder %s19, 3
      %p294 = scmp.ne.s32.totalorder %s289, %s291
      %p295 = scmp.eq.s32.totalorder %s19, 0
      %p296 = por %p294, %p295
      %p297 = scmp.ne.s32.totalorder %s289, %s291
      %p298 = scmp.eq.s32.totalorder %s24, 3
      %p299 = por %p297, %p298
      %p300 = scmp.ne.s32.totalorder %s291, %s292
      %p301 = scmp.eq.s32.totalorder %s24, 0
      %p302 = por %p300, %p301
      %p303 = scmp.ne.s32.totalorder %s291, %s292
      %p304 = scmp.eq.s32.totalorder %s25, 3
      %p305 = por %p303, %p304
      %p307 = scmp.ne.s32.totalorder %s292, %s306
      %p308 = scmp.eq.s32.totalorder %s25, 0
      %p309 = por %p307, %p308
      %p310 = scmp.le.s32.totalorder 1, %s19
      %p311 = scmp.lt.s32.totalorder %s19, 5
      %p312 = pnand %p310, %p311
      %p313 = pneg %p312
      // Predicated region
      $region9: #{jtnn_fused_forward.1} parent=5 // pred_check
        _
      $region10: #{jtnn_fused_forward.1} parent=5 // pred_check_branch
        %315 = sbr.rel (%p312) target = $region12
      $region11: #{jtnn_fused_forward.1} parent=5 // pred_region
        %s316 = ssub.s32 %s19, 1
        // Predicated region
        $region13: #{jtnn_fused_forward.1} parent=11 // pred_check
          %p317 = pneg %p92
        $region14: #{jtnn_fused_forward.1} parent=11 // pred_check_branch
          %319 = sbr.rel (%p317) target = $region16
        $region15: #{jtnn_fused_forward.1} parent=11 // pred_region
          _
        $region16: #{jtnn_fused_forward.1} parent=11 // pred_fallthru
          _
        // Predicated region
        $region17: #{jtnn_fused_forward.1} parent=11 // pred_check
          %p320 = pneg %p113
        $region18: #{jtnn_fused_forward.1} parent=11 // pred_check_branch
          %322 = sbr.rel (%p320) target = $region20
        $region19: #{jtnn_fused_forward.1} parent=11 // pred_region
          _
        $region20: #{jtnn_fused_forward.1} parent=11 // pred_fallthru
          _
        // Predicated region
        $region21: #{jtnn_fused_forward.1} parent=11 // pred_check
          %p323 = pneg %p134
        $region22: #{jtnn_fused_forward.1} parent=11 // pred_check_branch
          %325 = sbr.rel (%p323) target = $region24
        $region23: #{jtnn_fused_forward.1} parent=11 // pred_region
          _
        $region24: #{jtnn_fused_forward.1} parent=11 // pred_fallthru
          _
        // Predicated region
        $region25: #{jtnn_fused_forward.1} parent=11 // pred_check
          %p326 = pneg %p155
        $region26: #{jtnn_fused_forward.1} parent=11 // pred_check_branch
          %328 = sbr.rel (%p326) target = $region28
        $region27: #{jtnn_fused_forward.1} parent=11 // pred_region
          _
        $region28: #{jtnn_fused_forward.1} parent=11 // pred_fallthru
          _
        // Predicated region
        $region29: #{jtnn_fused_forward.1} parent=11 // pred_check
          %p329 = pneg %p176
        $region30: #{jtnn_fused_forward.1} parent=11 // pred_check_branch
          %331 = sbr.rel (%p329) target = $region32
        $region31: #{jtnn_fused_forward.1} parent=11 // pred_region
          _
        $region32: #{jtnn_fused_forward.1} parent=11 // pred_fallthru
          _
        // Predicated region
        $region33: #{jtnn_fused_forward.1} parent=11 // pred_check
          %p332 = pneg %p197
        $region34: #{jtnn_fused_forward.1} parent=11 // pred_check_branch
          %334 = sbr.rel (%p332) target = $region36
        $region35: #{jtnn_fused_forward.1} parent=11 // pred_region
          _
        $region36: #{jtnn_fused_forward.1} parent=11 // pred_fallthru
          _
        // Predicated region
        $region37: #{jtnn_fused_forward.1} parent=11 // pred_check
          %p335 = pneg %p218
        $region38: #{jtnn_fused_forward.1} parent=11 // pred_check_branch
          %337 = sbr.rel (%p335) target = $region40
        $region39: #{jtnn_fused_forward.1} parent=11 // pred_region
          _
        $region40: #{jtnn_fused_forward.1} parent=11 // pred_fallthru
          _
        // Predicated region
        $region41: #{jtnn_fused_forward.1} parent=11 // pred_check
          %p338 = pneg %p239
        $region42: #{jtnn_fused_forward.1} parent=11 // pred_check_branch
          %340 = sbr.rel (%p338) target = $region44
        $region43: #{jtnn_fused_forward.1} parent=11 // pred_region
          _
        $region44: #{jtnn_fused_forward.1} parent=11 // pred_fallthru
          _
        // Predicated region
        $region45: #{jtnn_fused_forward.1} parent=11 // pred_check
          %p341 = pneg %p260
        $region46: #{jtnn_fused_forward.1} parent=11 // pred_check_branch
          %343 = sbr.rel (%p341) target = $region48
        $region47: #{jtnn_fused_forward.1} parent=11 // pred_region
          _
        $region48: #{jtnn_fused_forward.1} parent=11 // pred_fallthru
          _
        // Predicated region
        $region49: #{jtnn_fused_forward.1} parent=11 // pred_check
          %p344 = pneg %p281
        $region50: #{jtnn_fused_forward.1} parent=11 // pred_check_branch
          %346 = sbr.rel (%p344) target = $region52
        $region51: #{jtnn_fused_forward.1} parent=11 // pred_region
          _
        $region52: #{jtnn_fused_forward.1} parent=11 // pred_fallthru
          _
      $region12: #{jtnn_fused_forward.1} parent=5 // pred_fallthru
        _
      %p347 = scmp.lt.s32.totalorder %s19, 4
      // Predicated region
      $region53: #{jtnn_fused_forward.1} parent=5 // pred_check
        %p348 = pneg %p347
      $region54: #{jtnn_fused_forward.1} parent=5 // pred_check_branch
        %350 = sbr.rel (%p348) target = $region56
      $region55: #{jtnn_fused_forward.1} parent=5 // pred_region
        // Predicated region
        $region57: #{jtnn_fused_forward.1} parent=55 // pred_check
          %p351 = pneg %p39
        $region58: #{jtnn_fused_forward.1} parent=55 // pred_check_branch
          %353 = sbr.rel (%p351) target = $region60
        $region59: #{jtnn_fused_forward.1} parent=55 // pred_region
          %p354 = scmp.lt.s32.totalorder %s19, 3
          %s355 = scalar_select %p354, %s19, 3
          %s356 = smul.addr %s355, 2
          %s357 = smul.addr %s356, 8
          %s358 = scalar_lea.vmem %s0, %s357
        $region60: #{jtnn_fused_forward.1} parent=55 // pred_fallthru
          _
        // Predicated region
        $region61: #{jtnn_fused_forward.1} parent=55 // pred_check
          %p359 = pneg %p65
        $region62: #{jtnn_fused_forward.1} parent=55 // pred_check_branch
          %361 = sbr.rel (%p359) target = $region64
        $region63: #{jtnn_fused_forward.1} parent=55 // pred_region
          %p362 = scmp.lt.s32.totalorder %s19, 3
          %s363 = scalar_select %p362, %s19, 3
          %s364 = smul.addr %s363, 16
          %s365 = smul.addr %s364, 8
          %s366 = scalar_lea.vmem %s1, %s365
        $region64: #{jtnn_fused_forward.1} parent=55 // pred_fallthru
          _
      $region56: #{jtnn_fused_forward.1} parent=5 // pred_fallthru
        _
      %p367 = scmp.le.s32.totalorder 1, %s19
      %p368 = scmp.lt.s32.totalorder %s19, 5
      %p369 = pnand %p367, %p368
      %p370 = pneg %p369
      // Predicated region
      $region65: #{jtnn_fused_forward.1} parent=5 // pred_check
        _
      $region66: #{jtnn_fused_forward.1} parent=5 // pred_check_branch
        %372 = sbr.rel (%p369) target = $region68
      $region67: #{jtnn_fused_forward.1} parent=5 // pred_region
        %s373 = ssub.s32 %s19, 1
        %p374 = scmp.lt.s32.totalorder %s24, 3
        %s375 = scalar_select %p374, %s24, 3
        %s376 = smul.addr %s375, 2
        %s377 = smul.addr %s376, 8
        %s378 = scalar_lea.vmem %s0, %s377
        %p379 = pneg %p45
        %p380 = pneg %p42
        %p381 = scmp.lt.s32.totalorder %s24, 3
        %s382 = scalar_select %p381, %s24, 3
        %s383 = smul.addr %s382, 16
        %s384 = smul.addr %s383, 8
        %s385 = scalar_lea.vmem %s1, %s384
        %p386 = pneg %p71
        %p387 = pneg %p68
        %p388 = pneg %p92
        %p389 = pneg %p89
        %p390 = pneg %p113
        %p391 = pneg %p110
        %p392 = pneg %p134
        %p393 = pneg %p131
        %p394 = pneg %p155
        %p395 = pneg %p152
        %p396 = pneg %p176
        %p397 = pneg %p173
        %p398 = pneg %p197
        %p399 = pneg %p194
        %p400 = pneg %p218
        %p401 = pneg %p215
        %p402 = pneg %p239
        %p403 = pneg %p236
        %p404 = pneg %p260
        %p405 = pneg %p257
        %p406 = pneg %p281
        %p407 = pneg %p278
        %p408 = pneg %p302
        %p409 = pneg %p299
        %p410 = scmp.lt.s32.totalorder %s24, 3
        %s411 = scalar_select %p410, %s24, 3
        %s412 = smul.addr %s411, 2
        %s413 = smul.addr %s412, 8
        %s414 = scalar_lea.vmem %s0, %s413
        %p415 = scmp.lt.s32.totalorder %s24, 3
        %s416 = scalar_select %p415, %s24, 3
        %s417 = smul.addr %s416, 16
        %s418 = smul.addr %s417, 8
        %s419 = scalar_lea.vmem %s1, %s418
        %p420 = scmp.eq.s32.totalorder %s24, 0
        // Predicated region
        $region69: #{jtnn_fused_forward.1} parent=67 // pred_check
          %p421 = pneg %p420
        $region70: #{jtnn_fused_forward.1} parent=67 // pred_check_branch
          %423 = sbr.rel (%p421) target = $region72
        $region71: #{jtnn_fused_forward.1} parent=67 // pred_region
          %vm424 = vcmask 261120
          %425 = vst.msk [vmem:[#allocation2] sm:$0xff] %vm424, 0.0
          %426 = vst.msk [vmem:[#allocation2 + $0x8] sm:$0xff] %vm424, 0.0
          %427 = vst.msk [vmem:[#allocation2 + $0x10] sm:$0xff] %vm424, 0.0
          %428 = vst.msk [vmem:[#allocation2 + $0x18] sm:$0xff] %vm424, 0.0
          %429 = vst.msk [vmem:[#allocation2 + $0x20] sm:$0xff] %vm424, 0.0
          %430 = vst.msk [vmem:[#allocation2 + $0x28] sm:$0xff] %vm424, 0.0
          %431 = vst.msk [vmem:[#allocation2 + $0x30] sm:$0xff] %vm424, 0.0
          %432 = vst.msk [vmem:[#allocation2 + $0x38] sm:$0xff] %vm424, 0.0
        $region72: #{jtnn_fused_forward.1} parent=67 // pred_fallthru
          _
        %v433 = vld [vmem:[%s414] sm:$0xff]
        %v434 = vld [vmem:[%s414 + $0x8] sm:$0xff]
        %v435 = vld [vmem:[%s419] sm:$0xff]
        %v436 = vld [vmem:[%s419 + $0x8] sm:$0xff]
        %v437 = vld [vmem:[%s419 + $0x10] sm:$0xff]
        %v438 = vld [vmem:[%s419 + $0x18] sm:$0xff]
        %v439 = vld [vmem:[%s419 + $0x20] sm:$0xff]
        %v440 = vld [vmem:[%s419 + $0x28] sm:$0xff]
        %v441 = vld [vmem:[%s419 + $0x30] sm:$0xff]
        %v442 = vld [vmem:[%s419 + $0x38] sm:$0xff]
        %v443 = vld [vmem:[%s419 + $0x40] sm:$0xff]
        %v444 = vld [vmem:[%s419 + $0x48] sm:$0xff]
        %v445 = vld [vmem:[%s419 + $0x50] sm:$0xff]
        %v446 = vld [vmem:[%s419 + $0x58] sm:$0xff]
        %v447 = vld [vmem:[%s419 + $0x60] sm:$0xff]
        %v448 = vld [vmem:[%s419 + $0x68] sm:$0xff]
        %v449 = vld [vmem:[%s419 + $0x70] sm:$0xff]
        %v450 = vld [vmem:[%s419 + $0x78] sm:$0xff]
        %v451 = vld [vmem:[#allocation2] sm:$0xff]
        %v452 = vld [vmem:[#allocation2 + $0x8] sm:$0xff]
        %v453 = vld [vmem:[#allocation2 + $0x10] sm:$0xff]
        %v454 = vld [vmem:[#allocation2 + $0x18] sm:$0xff]
        %v455 = vld [vmem:[#allocation2 + $0x20] sm:$0xff]
        %v456 = vld [vmem:[#allocation2 + $0x28] sm:$0xff]
        %v457 = vld [vmem:[#allocation2 + $0x30] sm:$0xff]
        %v458 = vld [vmem:[#allocation2 + $0x38] sm:$0xff]
        %v459 = vlaneseq
        %v460 = vand.u32 %v459, 127
        %461 = vset.pattern.permute.xlu0 0
        %462 = vperm.xlu0 %461, %v435
        %v463 = vpop.permute.xlu0 %462
        %464 = vset.pattern.permute.xlu0 0
        %465 = vperm.xlu0 %464, %v436
        %v466 = vpop.permute.xlu0 %465
        %467 = vset.pattern.permute.xlu0 0
        %468 = vperm.xlu0 %467, %v437
        %v469 = vpop.permute.xlu0 %468
        %470 = vset.pattern.permute.xlu0 0
        %471 = vperm.xlu0 %470, %v438
        %v472 = vpop.permute.xlu0 %471
        %473 = vset.pattern.permute.xlu0 0
        %474 = vperm.xlu0 %473, %v439
        %v475 = vpop.permute.xlu0 %474
        %476 = vset.pattern.permute.xlu0 0
        %477 = vperm.xlu0 %476, %v440
        %v478 = vpop.permute.xlu0 %477
        %479 = vset.pattern.permute.xlu0 0
        %480 = vperm.xlu0 %479, %v441
        %v481 = vpop.permute.xlu0 %480
        %482 = vset.pattern.permute.xlu0 0
        %483 = vperm.xlu0 %482, %v442
        %v484 = vpop.permute.xlu0 %483
        %485 = vset.pattern.permute.xlu0 0
        %486 = vperm.xlu0 %485, %v443
        %v487 = vpop.permute.xlu0 %486
        %488 = vset.pattern.permute.xlu0 0
        %489 = vperm.xlu0 %488, %v444
        %v490 = vpop.permute.xlu0 %489
        %491 = vset.pattern.permute.xlu0 0
        %492 = vperm.xlu0 %491, %v445
        %v493 = vpop.permute.xlu0 %492
        %494 = vset.pattern.permute.xlu0 0
        %495 = vperm.xlu0 %494, %v446
        %v496 = vpop.permute.xlu0 %495
        %497 = vset.pattern.permute.xlu0 0
        %498 = vperm.xlu0 %497, %v447
        %v499 = vpop.permute.xlu0 %498
        %500 = vset.pattern.permute.xlu0 0
        %501 = vperm.xlu0 %500, %v448
        %v502 = vpop.permute.xlu0 %501
        %503 = vset.pattern.permute.xlu0 0
        %504 = vperm.xlu0 %503, %v449
        %v505 = vpop.permute.xlu0 %504
        %506 = vset.pattern.permute.xlu0 0
        %507 = vperm.xlu0 %506, %v450
        %v508 = vpop.permute.xlu0 %507
        %vm509 = vcmp.eq.s32.totalorder %v463, %v460
        %vm510 = vcmp.eq.s32.totalorder %v466, %v460
        %vm511 = vcmp.eq.s32.totalorder %v469, %v460
        %vm512 = vcmp.eq.s32.totalorder %v472, %v460
        %vm513 = vcmp.eq.s32.totalorder %v475, %v460
        %vm514 = vcmp.eq.s32.totalorder %v478, %v460
        %vm515 = vcmp.eq.s32.totalorder %v481, %v460
        %vm516 = vcmp.eq.s32.totalorder %v484, %v460
        %vm517 = vcmp.eq.s32.totalorder %v487, %v460
        %vm518 = vcmp.eq.s32.totalorder %v490, %v460
        %vm519 = vcmp.eq.s32.totalorder %v493, %v460
        %vm520 = vcmp.eq.s32.totalorder %v496, %v460
        %vm521 = vcmp.eq.s32.totalorder %v499, %v460
        %vm522 = vcmp.eq.s32.totalorder %v502, %v460
        %vm523 = vcmp.eq.s32.totalorder %v505, %v460
        %vm524 = vcmp.eq.s32.totalorder %v508, %v460
        %v525 = vsel %vm509, 1, 0
        %v526 = vsel %vm510, 1, 0
        %v527 = vsel %vm511, 1, 0
        %v528 = vsel %vm512, 1, 0
        %v529 = vsel %vm513, 1, 0
        %v530 = vsel %vm514, 1, 0
        %v531 = vsel %vm515, 1, 0
        %v532 = vsel %vm516, 1, 0
        %v533 = vsel %vm517, 1, 0
        %v534 = vsel %vm518, 1, 0
        %v535 = vsel %vm519, 1, 0
        %v536 = vsel %vm520, 1, 0
        %v537 = vsel %vm521, 1, 0
        %v538 = vsel %vm522, 1, 0
        %v539 = vsel %vm523, 1, 0
        %v540 = vsel %vm524, 1, 0
        %v541 = vcvt.s32.f32 %v525
        %v542 = vcvt.s32.f32 %v526
        %v543 = vcvt.s32.f32 %v527
        %v544 = vcvt.s32.f32 %v528
        %v545 = vcvt.s32.f32 %v529
        %v546 = vcvt.s32.f32 %v530
        %v547 = vcvt.s32.f32 %v531
        %v548 = vcvt.s32.f32 %v532
        %v549 = vcvt.s32.f32 %v533
        %v550 = vcvt.s32.f32 %v534
        %v551 = vcvt.s32.f32 %v535
        %v552 = vcvt.s32.f32 %v536
        %v553 = vcvt.s32.f32 %v537
        %v554 = vcvt.s32.f32 %v538
        %v555 = vcvt.s32.f32 %v539
        %v556 = vcvt.s32.f32 %v540
        %vm557 = vcmask 523264
        %v559 = vsel %vm557, %v541, 0
        %v562 = vsel %vm557, %v542, 0
        %v565 = vsel %vm557, %v543, 0
        %v568 = vsel %vm557, %v544, 0
        %v571 = vsel %vm557, %v545, 0
        %v574 = vsel %vm557, %v546, 0
        %v577 = vsel %vm557, %v547, 0
        %v580 = vsel %vm557, %v548, 0
        %v583 = vsel %vm557, %v549, 0
        %v586 = vsel %vm557, %v550, 0
        %v589 = vsel %vm557, %v551, 0
        %v592 = vsel %vm557, %v552, 0
        %v595 = vsel %vm557, %v553, 0
        %v598 = vsel %vm557, %v554, 0
        %v601 = vsel %vm557, %v555, 0
        %v604 = vsel %vm557, %v556, 0
        %606 = vmatprep.subr.mxu0 0.0
        %607 = vmatpush1.msra.mxu0 %v451
        %608 = vmatprep.subr.mxu0 0.0
        %609 = vmatpush1.msra.mxu0 %v452
        %610 = vmatprep.subr.mxu0 0.0
        %611 = vmatpush1.msra.mxu0 %v453
        %612 = vmatprep.subr.mxu0 0.0
        %613 = vmatpush1.msra.mxu0 %v454
        %614 = vmatprep.subr.mxu0 0.0
        %615 = vmatpush1.msra.mxu0 %v455
        %616 = vmatprep.subr.mxu0 0.0
        %617 = vmatpush1.msra.mxu0 %v456
        %618 = vmatprep.subr.mxu0 0.0
        %619 = vmatpush1.msra.mxu0 %v457
        %620 = vmatprep.subr.mxu0 0.0
        %621 = vmatpush1.msra.mxu0 %v458
        %622 = vmatprep.subr.mxu0 0.0
        %623 = vmatpush1.msra.mxu0 0.0
        %624 = vmatprep.subr.mxu0 0.0
        %625 = vmatpush1.msra.mxu0 0.0
        %626 = vmatprep.subr.mxu0 0.0
        %627 = vmatpush1.msra.mxu0 0.0
        %628 = vmatprep.subr.mxu0 0.0
        %629 = vmatpush1.msra.mxu0 0.0
        %630 = vmatprep.subr.mxu0 0.0
        %631 = vmatpush1.msra.mxu0 0.0
        %632 = vmatprep.subr.mxu0 0.0
        %633 = vmatpush1.msra.mxu0 0.0
        %634 = vmatprep.subr.mxu0 0.0
        %635 = vmatpush1.msra.mxu0 0.0
        %636 = vmatprep.subr.mxu0 0.0
        %637 = vmatpush1.msra.mxu0 0.0
        %638 = vmatprep.subr.mxu0 0.0
        %639 = vmatpush1.msra.mxu0 0.0
        %640 = vmatprep.subr.mxu0 0.0
        %641 = vmatpush1.msra.mxu0 0.0
        %642 = vmatprep.subr.mxu0 0.0
        %643 = vmatpush1.msra.mxu0 0.0
        %644 = vmatprep.subr.mxu0 0.0
        %645 = vmatpush1.msra.mxu0 0.0
        %646 = vmatprep.subr.mxu0 0.0
        %647 = vmatpush1.msra.mxu0 0.0
        %648 = vmatprep.subr.mxu0 0.0
        %649 = vmatpush1.msra.mxu0 0.0
        %650 = vmatprep.subr.mxu0 0.0
        %651 = vmatpush1.msra.mxu0 0.0
        %652 = vmatprep.subr.mxu0 0.0
        %653 = vmatpush1.msra.mxu0 0.0
        %654 = vmatprep.subr.mxu0 0.0
        %655 = vmatpush1.msra.mxu0 0.0
        %656 = vmatprep.subr.mxu0 0.0
        %657 = vmatpush1.msra.mxu0 0.0
        %658 = vmatprep.subr.mxu0 0.0
        %659 = vmatpush1.msra.mxu0 0.0
        %660 = vmatprep.subr.mxu0 0.0
        %661 = vmatpush1.msra.mxu0 0.0
        %662 = vmatprep.subr.mxu0 0.0
        %663 = vmatpush1.msra.mxu0 0.0
        %664 = vmatprep.subr.mxu0 0.0
        %665 = vmatpush1.msra.mxu0 0.0
        %666 = vmatprep.subr.mxu0 0.0
        %667 = vmatpush1.msra.mxu0 0.0
        %668 = vmatprep.subr.mxu0 0.0
        %669 = vmatpush1.msra.mxu0 0.0
        %670 = vmatprep.mubr.f32.mxu0 0.0
        %671 = vmatmul.mubr.f32.gmra.mrb[0].mxu0 %v559
        %v672 = vpop.f32.mrb[0].mxu0
        %v673 = vadd.f32 0.0, %v672
        %v674 = vpop.f32.mrb[0].mxu0
        %675 = vmatprep.mubr.f32.mxu0 0.0
        %676 = vmatmul.mubr.f32.gmra.mrb[0].mxu0 %v562
        %v677 = vpop.f32.mrb[0].mxu0
        %v678 = vadd.f32 0.0, %v677
        %v679 = vpop.f32.mrb[0].mxu0
        %680 = vmatprep.mubr.f32.mxu0 0.0
        %681 = vmatmul.mubr.f32.gmra.mrb[0].mxu0 %v565
        %v682 = vpop.f32.mrb[0].mxu0
        %v683 = vadd.f32 0.0, %v682
        %v684 = vpop.f32.mrb[0].mxu0
        %685 = vmatprep.mubr.f32.mxu0 0.0
        %686 = vmatmul.mubr.f32.gmra.mrb[0].mxu0 %v568
        %v687 = vpop.f32.mrb[0].mxu0
        %v688 = vadd.f32 0.0, %v687
        %v689 = vpop.f32.mrb[0].mxu0
        %690 = vmatprep.mubr.f32.mxu0 0.0
        %691 = vmatmul.mubr.f32.gmra.mrb[0].mxu0 %v571
        %v692 = vpop.f32.mrb[0].mxu0
        %v693 = vadd.f32 0.0, %v692
        %v694 = vpop.f32.mrb[0].mxu0
        %695 = vmatprep.mubr.f32.mxu0 0.0
        %696 = vmatmul.mubr.f32.gmra.mrb[0].mxu0 %v574
        %v697 = vpop.f32.mrb[0].mxu0
        %v698 = vadd.f32 0.0, %v697
        %v699 = vpop.f32.mrb[0].mxu0
        %700 = vmatprep.mubr.f32.mxu0 0.0
        %701 = vmatmul.mubr.f32.gmra.mrb[0].mxu0 %v577
        %v702 = vpop.f32.mrb[0].mxu0
        %v703 = vadd.f32 0.0, %v702
        %v704 = vpop.f32.mrb[0].mxu0
        %705 = vmatprep.mubr.f32.mxu0 0.0
        %706 = vmatmul.mubr.f32.gmra.mrb[0].mxu0 %v580
        %v707 = vpop.f32.mrb[0].mxu0
        %v708 = vadd.f32 0.0, %v707
        %v709 = vpop.f32.mrb[0].mxu0
        %710 = vmatprep.mubr.f32.mxu0 0.0
        %711 = vmatmul.mubr.f32.gmra.mrb[0].mxu0 %v583
        %v712 = vpop.f32.mrb[0].mxu0
        %v713 = vadd.f32 0.0, %v712
        %v714 = vpop.f32.mrb[0].mxu0
        %715 = vmatprep.mubr.f32.mxu0 0.0
        %716 = vmatmul.mubr.f32.gmra.mrb[0].mxu0 %v586
        %v717 = vpop.f32.mrb[0].mxu0
        %v718 = vadd.f32 0.0, %v717
        %v719 = vpop.f32.mrb[0].mxu0
        %720 = vmatprep.mubr.f32.mxu0 0.0
        %721 = vmatmul.mubr.f32.gmra.mrb[0].mxu0 %v589
        %v722 = vpop.f32.mrb[0].mxu0
        %v723 = vadd.f32 0.0, %v722
        %v724 = vpop.f32.mrb[0].mxu0
        %725 = vmatprep.mubr.f32.mxu0 0.0
        %726 = vmatmul.mubr.f32.gmra.mrb[0].mxu0 %v592
        %v727 = vpop.f32.mrb[0].mxu0
        %v728 = vadd.f32 0.0, %v727
        %v729 = vpop.f32.mrb[0].mxu0
        %730 = vmatprep.mubr.f32.mxu0 0.0
        %731 = vmatmul.mubr.f32.gmra.mrb[0].mxu0 %v595
        %v732 = vpop.f32.mrb[0].mxu0
        %v733 = vadd.f32 0.0, %v732
        %v734 = vpop.f32.mrb[0].mxu0
        %735 = vmatprep.mubr.f32.mxu0 0.0
        %736 = vmatmul.mubr.f32.gmra.mrb[0].mxu0 %v598
        %v737 = vpop.f32.mrb[0].mxu0
        %v738 = vadd.f32 0.0, %v737
        %v739 = vpop.f32.mrb[0].mxu0
        %740 = vmatprep.mubr.f32.mxu0 0.0
        %741 = vmatmul.mubr.f32.gmra.mrb[0].mxu0 %v601
        %v742 = vpop.f32.mrb[0].mxu0
        %v743 = vadd.f32 0.0, %v742
        %v744 = vpop.f32.mrb[0].mxu0
        %745 = vmatprep.mubr.f32.mxu0 0.0
        %746 = vmatmul.mubr.f32.gmra.mrb[0].mxu0 %v604
        %v747 = vpop.f32.mrb[0].mxu0
        %v748 = vadd.f32 0.0, %v747
        %v749 = vpop.f32.mrb[0].mxu0
        %750 = vdwg.mxu0
        %vm751 = vcmask 261120
        %v752 = vsel %vm751, %v673, 0.0
        %v753 = vsel %vm751, %v683, 0.0
        %v754 = vadd.f32 %v752, %v753
        %v755 = vsel %vm751, %v693, 0.0
        %v756 = vadd.f32 %v754, %v755
        %v757 = vsel %vm751, %v703, 0.0
        %v758 = vadd.f32 %v756, %v757
        %v759 = vsel %vm751, %v713, 0.0
        %v760 = vadd.f32 %v758, %v759
        %v761 = vsel %vm751, %v723, 0.0
        %v762 = vadd.f32 %v760, %v761
        %v763 = vsel %vm751, %v733, 0.0
        %v764 = vadd.f32 %v762, %v763
        %v765 = vsel %vm751, %v743, 0.0
        %v766 = vadd.f32 %v764, %v765
        %v767 = vsel %vm751, %v678, 0.0
        %v768 = vsel %vm751, %v688, 0.0
        %v769 = vadd.f32 %v767, %v768
        %v770 = vsel %vm751, %v698, 0.0
        %v771 = vadd.f32 %v769, %v770
        %v772 = vsel %vm751, %v708, 0.0
        %v773 = vadd.f32 %v771, %v772
        %v774 = vsel %vm751, %v718, 0.0
        %v775 = vadd.f32 %v773, %v774
        %v776 = vsel %vm751, %v728, 0.0
        %v777 = vadd.f32 %v775, %v776
        %v778 = vsel %vm751, %v738, 0.0
        %v779 = vadd.f32 %v777, %v778
        %v780 = vsel %vm751, %v748, 0.0
        %v781 = vadd.f32 %v779, %v780
        %784 = vrot.lane.b32.xlu0 %v766, 32
        %v785 = vpop.permute.xlu0 %784
        %786 = vrot.lane.b32.xlu0 %v781, 32
        %v787 = vpop.permute.xlu0 %786
        %v790 = vsel %vm751, %v433, %v785
        %v791 = vsel %vm751, %v434, %v787
        %v792 = vld [vmem:[%s4] sm:$0xff]
        %v793 = vld [vmem:[%s4 + $0x8] sm:$0xff]
        %v794 = vld [vmem:[%s4 + $0x10] sm:$0xff]
        %v795 = vld [vmem:[%s4 + $0x18] sm:$0xff]
        %v796 = vld [vmem:[%s4 + $0x20] sm:$0xff]
        %v797 = vld [vmem:[%s4 + $0x28] sm:$0xff]
        %v798 = vld [vmem:[%s4 + $0x30] sm:$0xff]
        %v799 = vld [vmem:[%s4 + $0x38] sm:$0xff]
        %v800 = vld [vmem:[%s5] sm:$0x1]
        %v802 = vlaneseq
        %v803 = vshrl.u32 %v802, 7
        %v804 = vsub.s32 0, %v803
        %v805 = vrot.slane %v800, %v804
        %v808 = vsel %vm557, %v790, 0
        %v811 = vsel %vm557, %v791, 0
        %813 = vmatprep.subr.mxu0 0.0
        %814 = vmatpush1.msra.mxu0 %v792
        %815 = vmatprep.subr.mxu0 0.0
        %816 = vmatpush1.msra.mxu0 %v793
        %817 = vmatprep.subr.mxu0 0.0
        %818 = vmatpush1.msra.mxu0 %v794
        %819 = vmatprep.subr.mxu0 0.0
        %820 = vmatpush1.msra.mxu0 %v795
        %821 = vmatprep.subr.mxu0 0.0
        %822 = vmatpush1.msra.mxu0 %v796
        %823 = vmatprep.subr.mxu0 0.0
        %824 = vmatpush1.msra.mxu0 %v797
        %825 = vmatprep.subr.mxu0 0.0
        %826 = vmatpush1.msra.mxu0 %v798
        %827 = vmatprep.subr.mxu0 0.0
        %828 = vmatpush1.msra.mxu0 %v799
        %829 = vmatprep.subr.mxu0 0.0
        %830 = vmatpush1.msra.mxu0 0.0
        %831 = vmatprep.subr.mxu0 0.0
        %832 = vmatpush1.msra.mxu0 0.0
        %833 = vmatprep.subr.mxu0 0.0
        %834 = vmatpush1.msra.mxu0 0.0
        %835 = vmatprep.subr.mxu0 0.0
        %836 = vmatpush1.msra.mxu0 0.0
        %837 = vmatprep.subr.mxu0 0.0
        %838 = vmatpush1.msra.mxu0 0.0
        %839 = vmatprep.subr.mxu0 0.0
        %840 = vmatpush1.msra.mxu0 0.0
        %841 = vmatprep.subr.mxu0 0.0
        %842 = vmatpush1.msra.mxu0 0.0
        %843 = vmatprep.subr.mxu0 0.0
        %844 = vmatpush1.msra.mxu0 0.0
        %845 = vmatprep.subr.mxu0 0.0
        %846 = vmatpush1.msra.mxu0 0.0
        %847 = vmatprep.subr.mxu0 0.0
        %848 = vmatpush1.msra.mxu0 0.0
        %849 = vmatprep.subr.mxu0 0.0
        %850 = vmatpush1.msra.mxu0 0.0
        %851 = vmatprep.subr.mxu0 0.0
        %852 = vmatpush1.msra.mxu0 0.0
        %853 = vmatprep.subr.mxu0 0.0
        %854 = vmatpush1.msra.mxu0 0.0
        %855 = vmatprep.subr.mxu0 0.0
        %856 = vmatpush1.msra.mxu0 0.0
        %857 = vmatprep.subr.mxu0 0.0
        %858 = vmatpush1.msra.mxu0 0.0
        %859 = vmatprep.subr.mxu0 0.0
        %860 = vmatpush1.msra.mxu0 0.0
        %861 = vmatprep.subr.mxu0 0.0
        %862 = vmatpush1.msra.mxu0 0.0
        %863 = vmatprep.subr.mxu0 0.0
        %864 = vmatpush1.msra.mxu0 0.0
        %865 = vmatprep.subr.mxu0 0.0
        %866 = vmatpush1.msra.mxu0 0.0
        %867 = vmatprep.subr.mxu0 0.0
        %868 = vmatpush1.msra.mxu0 0.0
        %869 = vmatprep.subr.mxu0 0.0
        %870 = vmatpush1.msra.mxu0 0.0
        %871 = vmatprep.subr.mxu0 0.0
        %872 = vmatpush1.msra.mxu0 0.0
        %873 = vmatprep.subr.mxu0 0.0
        %874 = vmatpush1.msra.mxu0 0.0
        %875 = vmatprep.subr.mxu0 0.0
        %876 = vmatpush1.msra.mxu0 0.0
        %877 = vmatprep.mubr.f32.mxu0 0.0
        %878 = vmatmul.mubr.f32.gmra.mrb[0].mxu0 %v808
        %v879 = vpop.f32.mrb[0].mxu0
        %v880 = vadd.f32 %v805, %v879
        %v881 = vpop.f32.mrb[0].mxu0
        %882 = vmatprep.mubr.f32.mxu0 0.0
        %883 = vmatmul.mubr.f32.gmra.mrb[0].mxu0 %v811
        %v884 = vpop.f32.mrb[0].mxu0
        %v885 = vadd.f32 %v805, %v884
        %v886 = vpop.f32.mrb[0].mxu0
        %887 = vdwg.mxu0
        %v888 = vxor.u32 %v880, 2147483648
        %v889 = vxor.u32 %v885, 2147483648
        %v890 = vmul.f32 %v888, 1.442695
        %v891 = vpow.pop %v890
        %v892 = vmul.f32 %v889, 1.442695
        %v893 = vpow.pop %v892
        %v894 = vadd.f32 %v891, 1.0
        %v895 = vadd.f32 %v893, 1.0
        %v896 = vrcp.pop %v894
        %v897 = vmul.f32 1.0, %v896
        %v898 = vrcp.pop %v895
        %v899 = vmul.f32 1.0, %v898
        %v900 = vld [vmem:[%s6] sm:$0xff]
        %v901 = vld [vmem:[%s6 + $0x8] sm:$0xff]
        %v902 = vld [vmem:[%s6 + $0x10] sm:$0xff]
        %v903 = vld [vmem:[%s6 + $0x18] sm:$0xff]
        %v904 = vld [vmem:[%s7] sm:$0x1]
        %v906 = vlaneseq
        %v907 = vshrl.u32 %v906, 7
        %v908 = vsub.s32 0, %v907
        %v909 = vrot.slane %v904, %v908
        %v912 = vsel %vm751, %v673, 0
        %v915 = vsel %vm751, %v678, 0
        %v918 = vsel %vm751, %v683, 0
        %v921 = vsel %vm751, %v688, 0
        %v924 = vsel %vm751, %v693, 0
        %v927 = vsel %vm751, %v698, 0
        %v930 = vsel %vm751, %v703, 0
        %v933 = vsel %vm751, %v708, 0
        %v936 = vsel %vm751, %v713, 0
        %v939 = vsel %vm751, %v718, 0
        %v942 = vsel %vm751, %v723, 0
        %v945 = vsel %vm751, %v728, 0
        %v948 = vsel %vm751, %v733, 0
        %v951 = vsel %vm751, %v738, 0
        %v954 = vsel %vm751, %v743, 0
        %v957 = vsel %vm751, %v748, 0
        %959 = vmatprep.subr.mxu0 0.0
        %960 = vmatpush1.msra.mxu0 %v900
        %961 = vmatprep.subr.mxu0 0.0
        %962 = vmatpush1.msra.mxu0 %v901
        %963 = vmatprep.subr.mxu0 0.0
        %964 = vmatpush1.msra.mxu0 %v902
        %965 = vmatprep.subr.mxu0 0.0
        %966 = vmatpush1.msra.mxu0 %v903
        %967 = vmatprep.subr.mxu0 0.0
        %968 = vmatpush1.msra.mxu0 0.0
        %969 = vmatprep.subr.mxu0 0.0
        %970 = vmatpush1.msra.mxu0 0.0
        %971 = vmatprep.subr.mxu0 0.0
        %972 = vmatpush1.msra.mxu0 0.0
        %973 = vmatprep.subr.mxu0 0.0
        %974 = vmatpush1.msra.mxu0 0.0
        %975 = vmatprep.subr.mxu0 0.0
        %976 = vmatpush1.msra.mxu0 0.0
        %977 = vmatprep.subr.mxu0 0.0
        %978 = vmatpush1.msra.mxu0 0.0
        %979 = vmatprep.subr.mxu0 0.0
        %980 = vmatpush1.msra.mxu0 0.0
        %981 = vmatprep.subr.mxu0 0.0
        %982 = vmatpush1.msra.mxu0 0.0
        %983 = vmatprep.subr.mxu0 0.0
        %984 = vmatpush1.msra.mxu0 0.0
        %985 = vmatprep.subr.mxu0 0.0
        %986 = vmatpush1.msra.mxu0 0.0
        %987 = vmatprep.subr.mxu0 0.0
        %988 = vmatpush1.msra.mxu0 0.0
        %989 = vmatprep.subr.mxu0 0.0
        %990 = vmatpush1.msra.mxu0 0.0
        %991 = vmatprep.subr.mxu0 0.0
        %992 = vmatpush1.msra.mxu0 0.0
        %993 = vmatprep.subr.mxu0 0.0
        %994 = vmatpush1.msra.mxu0 0.0
        %995 = vmatprep.subr.mxu0 0.0
        %996 = vmatpush1.msra.mxu0 0.0
        %997 = vmatprep.subr.mxu0 0.0
        %998 = vmatpush1.msra.mxu0 0.0
        %999 = vmatprep.subr.mxu0 0.0
        %1000 = vmatpush1.msra.mxu0 0.0
        %1001 = vmatprep.subr.mxu0 0.0
        %1002 = vmatpush1.msra.mxu0 0.0
        %1003 = vmatprep.subr.mxu0 0.0
        %1004 = vmatpush1.msra.mxu0 0.0
        %1005 = vmatprep.subr.mxu0 0.0
        %1006 = vmatpush1.msra.mxu0 0.0
        %1007 = vmatprep.subr.mxu0 0.0
        %1008 = vmatpush1.msra.mxu0 0.0
        %1009 = vmatprep.subr.mxu0 0.0
        %1010 = vmatpush1.msra.mxu0 0.0
        %1011 = vmatprep.subr.mxu0 0.0
        %1012 = vmatpush1.msra.mxu0 0.0
        %1013 = vmatprep.subr.mxu0 0.0
        %1014 = vmatpush1.msra.mxu0 0.0
        %1015 = vmatprep.subr.mxu0 0.0
        %1016 = vmatpush1.msra.mxu0 0.0
        %1017 = vmatprep.subr.mxu0 0.0
        %1018 = vmatpush1.msra.mxu0 0.0
        %1019 = vmatprep.subr.mxu0 0.0
        %1020 = vmatpush1.msra.mxu0 0.0
        %1021 = vmatprep.subr.mxu0 0.0
        %1022 = vmatpush1.msra.mxu0 0.0
        %1023 = vmatprep.mubr.f32.mxu0 0.0
        %1024 = vmatmul.mubr.f32.gmra.mrb[0].mxu0 %v912
        %v1025 = vpop.f32.mrb[0].mxu0
        %v1026 = vadd.f32 %v909, %v1025
        %v1027 = vpop.f32.mrb[0].mxu0
        %1028 = vmatprep.mubr.f32.mxu0 0.0
        %1029 = vmatmul.mubr.f32.gmra.mrb[0].mxu0 %v915
        %v1030 = vpop.f32.mrb[0].mxu0
        %v1031 = vadd.f32 %v909, %v1030
        %v1032 = vpop.f32.mrb[0].mxu0
        %1033 = vmatprep.mubr.f32.mxu0 0.0
        %1034 = vmatmul.mubr.f32.gmra.mrb[0].mxu0 %v918
        %v1035 = vpop.f32.mrb[0].mxu0
        %v1036 = vadd.f32 %v909, %v1035
        %v1037 = vpop.f32.mrb[0].mxu0
        %1038 = vmatprep.mubr.f32.mxu0 0.0
        %1039 = vmatmul.mubr.f32.gmra.mrb[0].mxu0 %v921
        %v1040 = vpop.f32.mrb[0].mxu0
        %v1041 = vadd.f32 %v909, %v1040
        %v1042 = vpop.f32.mrb[0].mxu0
        %1043 = vmatprep.mubr.f32.mxu0 0.0
        %1044 = vmatmul.mubr.f32.gmra.mrb[0].mxu0 %v924
        %v1045 = vpop.f32.mrb[0].mxu0
        %v1046 = vadd.f32 %v909, %v1045
        %v1047 = vpop.f32.mrb[0].mxu0
        %1048 = vmatprep.mubr.f32.mxu0 0.0
        %1049 = vmatmul.mubr.f32.gmra.mrb[0].mxu0 %v927
        %v1050 = vpop.f32.mrb[0].mxu0
        %v1051 = vadd.f32 %v909, %v1050
        %v1052 = vpop.f32.mrb[0].mxu0
        %1053 = vmatprep.mubr.f32.mxu0 0.0
        %1054 = vmatmul.mubr.f32.gmra.mrb[0].mxu0 %v930
        %v1055 = vpop.f32.mrb[0].mxu0
        %v1056 = vadd.f32 %v909, %v1055
        %v1057 = vpop.f32.mrb[0].mxu0
        %1058 = vmatprep.mubr.f32.mxu0 0.0
        %1059 = vmatmul.mubr.f32.gmra.mrb[0].mxu0 %v933
        %v1060 = vpop.f32.mrb[0].mxu0
        %v1061 = vadd.f32 %v909, %v1060
        %v1062 = vpop.f32.mrb[0].mxu0
        %1063 = vmatprep.mubr.f32.mxu0 0.0
        %1064 = vmatmul.mubr.f32.gmra.mrb[0].mxu0 %v936
        %v1065 = vpop.f32.mrb[0].mxu0
        %v1066 = vadd.f32 %v909, %v1065
        %v1067 = vpop.f32.mrb[0].mxu0
        %1068 = vmatprep.mubr.f32.mxu0 0.0
        %1069 = vmatmul.mubr.f32.gmra.mrb[0].mxu0 %v939
        %v1070 = vpop.f32.mrb[0].mxu0
        %v1071 = vadd.f32 %v909, %v1070
        %v1072 = vpop.f32.mrb[0].mxu0
        %1073 = vmatprep.mubr.f32.mxu0 0.0
        %1074 = vmatmul.mubr.f32.gmra.mrb[0].mxu0 %v942
        %v1075 = vpop.f32.mrb[0].mxu0
        %v1076 = vadd.f32 %v909, %v1075
        %v1077 = vpop.f32.mrb[0].mxu0
        %1078 = vmatprep.mubr.f32.mxu0 0.0
        %1079 = vmatmul.mubr.f32.gmra.mrb[0].mxu0 %v945
        %v1080 = vpop.f32.mrb[0].mxu0
        %v1081 = vadd.f32 %v909, %v1080
        %v1082 = vpop.f32.mrb[0].mxu0
        %1083 = vmatprep.mubr.f32.mxu0 0.0
        %1084 = vmatmul.mubr.f32.gmra.mrb[0].mxu0 %v948
        %v1085 = vpop.f32.mrb[0].mxu0
        %v1086 = vadd.f32 %v909, %v1085
        %v1087 = vpop.f32.mrb[0].mxu0
        %1088 = vmatprep.mubr.f32.mxu0 0.0
        %1089 = vmatmul.mubr.f32.gmra.mrb[0].mxu0 %v951
        %v1090 = vpop.f32.mrb[0].mxu0
        %v1091 = vadd.f32 %v909, %v1090
        %v1092 = vpop.f32.mrb[0].mxu0
        %1093 = vmatprep.mubr.f32.mxu0 0.0
        %1094 = vmatmul.mubr.f32.gmra.mrb[0].mxu0 %v954
        %v1095 = vpop.f32.mrb[0].mxu0
        %v1096 = vadd.f32 %v909, %v1095
        %v1097 = vpop.f32.mrb[0].mxu0
        %1098 = vmatprep.mubr.f32.mxu0 0.0
        %1099 = vmatmul.mubr.f32.gmra.mrb[0].mxu0 %v957
        %v1100 = vpop.f32.mrb[0].mxu0
        %v1101 = vadd.f32 %v909, %v1100
        %v1102 = vpop.f32.mrb[0].mxu0
        %1103 = vdwg.mxu0
        %1120 = vrot.lane.b32.xlu0 %v1026, 32
        %v1121 = vpop.permute.xlu0 %1120
        %1122 = vrot.lane.b32.xlu0 %v1031, 32
        %v1123 = vpop.permute.xlu0 %1122
        %1124 = vrot.lane.b32.xlu0 %v1036, 32
        %v1125 = vpop.permute.xlu0 %1124
        %1126 = vrot.lane.b32.xlu0 %v1041, 32
        %v1127 = vpop.permute.xlu0 %1126
        %1128 = vrot.lane.b32.xlu0 %v1046, 32
        %v1129 = vpop.permute.xlu0 %1128
        %1130 = vrot.lane.b32.xlu0 %v1051, 32
        %v1131 = vpop.permute.xlu0 %1130
        %1132 = vrot.lane.b32.xlu0 %v1056, 32
        %v1133 = vpop.permute.xlu0 %1132
        %1134 = vrot.lane.b32.xlu0 %v1061, 32
        %v1135 = vpop.permute.xlu0 %1134
        %1136 = vrot.lane.b32.xlu0 %v1066, 32
        %v1137 = vpop.permute.xlu0 %1136
        %1138 = vrot.lane.b32.xlu0 %v1071, 32
        %v1139 = vpop.permute.xlu0 %1138
        %1140 = vrot.lane.b32.xlu0 %v1076, 32
        %v1141 = vpop.permute.xlu0 %1140
        %1142 = vrot.lane.b32.xlu0 %v1081, 32
        %v1143 = vpop.permute.xlu0 %1142
        %1144 = vrot.lane.b32.xlu0 %v1086, 32
        %v1145 = vpop.permute.xlu0 %1144
        %1146 = vrot.lane.b32.xlu0 %v1091, 32
        %v1147 = vpop.permute.xlu0 %1146
        %1148 = vrot.lane.b32.xlu0 %v1096, 32
        %v1149 = vpop.permute.xlu0 %1148
        %1150 = vrot.lane.b32.xlu0 %v1101, 32
        %v1151 = vpop.permute.xlu0 %1150
        %v1168 = vadd.f32 %v880, %v1121
        %v1169 = vadd.f32 %v885, %v1123
        %v1170 = vadd.f32 %v880, %v1125
        %v1171 = vadd.f32 %v885, %v1127
        %v1172 = vadd.f32 %v880, %v1129
        %v1173 = vadd.f32 %v885, %v1131
        %v1174 = vadd.f32 %v880, %v1133
        %v1175 = vadd.f32 %v885, %v1135
        %v1176 = vadd.f32 %v880, %v1137
        %v1177 = vadd.f32 %v885, %v1139
        %v1178 = vadd.f32 %v880, %v1141
        %v1179 = vadd.f32 %v885, %v1143
        %v1180 = vadd.f32 %v880, %v1145
        %v1181 = vadd.f32 %v885, %v1147
        %v1182 = vadd.f32 %v880, %v1149
        %v1183 = vadd.f32 %v885, %v1151
        %v1184 = vxor.u32 %v1168, 2147483648
        %v1185 = vxor.u32 %v1169, 2147483648
        %v1186 = vxor.u32 %v1170, 2147483648
        %v1187 = vxor.u32 %v1171, 2147483648
        %v1188 = vxor.u32 %v1172, 2147483648
        %v1189 = vxor.u32 %v1173, 2147483648
        %v1190 = vxor.u32 %v1174, 2147483648
        %v1191 = vxor.u32 %v1175, 2147483648
        %v1192 = vxor.u32 %v1176, 2147483648
        %v1193 = vxor.u32 %v1177, 2147483648
        %v1194 = vxor.u32 %v1178, 2147483648
        %v1195 = vxor.u32 %v1179, 2147483648
        %v1196 = vxor.u32 %v1180, 2147483648
        %v1197 = vxor.u32 %v1181, 2147483648
        %v1198 = vxor.u32 %v1182, 2147483648
        %v1199 = vxor.u32 %v1183, 2147483648
        %v1200 = vmul.f32 %v1184, 1.442695
        %v1201 = vpow.pop %v1200
        %v1202 = vmul.f32 %v1185, 1.442695
        %v1203 = vpow.pop %v1202
        %v1204 = vmul.f32 %v1186, 1.442695
        %v1205 = vpow.pop %v1204
        %v1206 = vmul.f32 %v1187, 1.442695
        %v1207 = vpow.pop %v1206
        %v1208 = vmul.f32 %v1188, 1.442695
        %v1209 = vpow.pop %v1208
        %v1210 = vmul.f32 %v1189, 1.442695
        %v1211 = vpow.pop %v1210
        %v1212 = vmul.f32 %v1190, 1.442695
        %v1213 = vpow.pop %v1212
        %v1214 = vmul.f32 %v1191, 1.442695
        %v1215 = vpow.pop %v1214
        %v1216 = vmul.f32 %v1192, 1.442695
        %v1217 = vpow.pop %v1216
        %v1218 = vmul.f32 %v1193, 1.442695
        %v1219 = vpow.pop %v1218
        %v1220 = vmul.f32 %v1194, 1.442695
        %v1221 = vpow.pop %v1220
        %v1222 = vmul.f32 %v1195, 1.442695
        %v1223 = vpow.pop %v1222
        %v1224 = vmul.f32 %v1196, 1.442695
        %v1225 = vpow.pop %v1224
        %v1226 = vmul.f32 %v1197, 1.442695
        %v1227 = vpow.pop %v1226
        %v1228 = vmul.f32 %v1198, 1.442695
        %v1229 = vpow.pop %v1228
        %v1230 = vmul.f32 %v1199, 1.442695
        %v1231 = vpow.pop %v1230
        %v1232 = vadd.f32 %v1201, 1.0
        %v1233 = vadd.f32 %v1203, 1.0
        %v1234 = vadd.f32 %v1205, 1.0
        %v1235 = vadd.f32 %v1207, 1.0
        %v1236 = vadd.f32 %v1209, 1.0
        %v1237 = vadd.f32 %v1211, 1.0
        %v1238 = vadd.f32 %v1213, 1.0
        %v1239 = vadd.f32 %v1215, 1.0
        %v1240 = vadd.f32 %v1217, 1.0
        %v1241 = vadd.f32 %v1219, 1.0
        %v1242 = vadd.f32 %v1221, 1.0
        %v1243 = vadd.f32 %v1223, 1.0
        %v1244 = vadd.f32 %v1225, 1.0
        %v1245 = vadd.f32 %v1227, 1.0
        %v1246 = vadd.f32 %v1229, 1.0
        %v1247 = vadd.f32 %v1231, 1.0
        %v1248 = vrcp.pop %v1232
        %v1249 = vmul.f32 1.0, %v1248
        %v1250 = vrcp.pop %v1233
        %v1251 = vmul.f32 1.0, %v1250
        %v1252 = vrcp.pop %v1234
        %v1253 = vmul.f32 1.0, %v1252
        %v1254 = vrcp.pop %v1235
        %v1255 = vmul.f32 1.0, %v1254
        %v1256 = vrcp.pop %v1236
        %v1257 = vmul.f32 1.0, %v1256
        %v1258 = vrcp.pop %v1237
        %v1259 = vmul.f32 1.0, %v1258
        %v1260 = vrcp.pop %v1238
        %v1261 = vmul.f32 1.0, %v1260
        %v1262 = vrcp.pop %v1239
        %v1263 = vmul.f32 1.0, %v1262
        %v1264 = vrcp.pop %v1240
        %v1265 = vmul.f32 1.0, %v1264
        %v1266 = vrcp.pop %v1241
        %v1267 = vmul.f32 1.0, %v1266
        %v1268 = vrcp.pop %v1242
        %v1269 = vmul.f32 1.0, %v1268
        %v1270 = vrcp.pop %v1243
        %v1271 = vmul.f32 1.0, %v1270
        %v1272 = vrcp.pop %v1244
        %v1273 = vmul.f32 1.0, %v1272
        %v1274 = vrcp.pop %v1245
        %v1275 = vmul.f32 1.0, %v1274
        %v1276 = vrcp.pop %v1246
        %v1277 = vmul.f32 1.0, %v1276
        %v1278 = vrcp.pop %v1247
        %v1279 = vmul.f32 1.0, %v1278
        %1280 = vrot.lane.b32.xlu0 %v673, 32
        %v1281 = vpop.permute.xlu0 %1280
        %1282 = vrot.lane.b32.xlu0 %v678, 32
        %v1283 = vpop.permute.xlu0 %1282
        %1284 = vrot.lane.b32.xlu0 %v683, 32
        %v1285 = vpop.permute.xlu0 %1284
        %1286 = vrot.lane.b32.xlu0 %v688, 32
        %v1287 = vpop.permute.xlu0 %1286
        %1288 = vrot.lane.b32.xlu0 %v693, 32
        %v1289 = vpop.permute.xlu0 %1288
        %1290 = vrot.lane.b32.xlu0 %v698, 32
        %v1291 = vpop.permute.xlu0 %1290
        %1292 = vrot.lane.b32.xlu0 %v703, 32
        %v1293 = vpop.permute.xlu0 %1292
        %1294 = vrot.lane.b32.xlu0 %v708, 32
        %v1295 = vpop.permute.xlu0 %1294
        %1296 = vrot.lane.b32.xlu0 %v713, 32
        %v1297 = vpop.permute.xlu0 %1296
        %1298 = vrot.lane.b32.xlu0 %v718, 32
        %v1299 = vpop.permute.xlu0 %1298
        %1300 = vrot.lane.b32.xlu0 %v723, 32
        %v1301 = vpop.permute.xlu0 %1300
        %1302 = vrot.lane.b32.xlu0 %v728, 32
        %v1303 = vpop.permute.xlu0 %1302
        %1304 = vrot.lane.b32.xlu0 %v733, 32
        %v1305 = vpop.permute.xlu0 %1304
        %1306 = vrot.lane.b32.xlu0 %v738, 32
        %v1307 = vpop.permute.xlu0 %1306
        %1308 = vrot.lane.b32.xlu0 %v743, 32
        %v1309 = vpop.permute.xlu0 %1308
        %1310 = vrot.lane.b32.xlu0 %v748, 32
        %v1311 = vpop.permute.xlu0 %1310
        %v1328 = vmul.f32 %v1249, %v1281
        %v1329 = vmul.f32 %v1251, %v1283
        %v1330 = vmul.f32 %v1253, %v1285
        %v1331 = vmul.f32 %v1255, %v1287
        %v1332 = vmul.f32 %v1257, %v1289
        %v1333 = vmul.f32 %v1259, %v1291
        %v1334 = vmul.f32 %v1261, %v1293
        %v1335 = vmul.f32 %v1263, %v1295
        %v1336 = vmul.f32 %v1265, %v1297
        %v1337 = vmul.f32 %v1267, %v1299
        %v1338 = vmul.f32 %v1269, %v1301
        %v1339 = vmul.f32 %v1271, %v1303
        %v1340 = vmul.f32 %v1273, %v1305
        %v1341 = vmul.f32 %v1275, %v1307
        %v1342 = vmul.f32 %v1277, %v1309
        %v1343 = vmul.f32 %v1279, %v1311
        %vm1344 = vcmask 523520
        %v1345 = vsel %vm1344, %v1328, 0.0
        %v1346 = vsel %vm1344, %v1330, 0.0
        %v1347 = vadd.f32 %v1345, %v1346
        %v1348 = vsel %vm1344, %v1332, 0.0
        %v1349 = vadd.f32 %v1347, %v1348
        %v1350 = vsel %vm1344, %v1334, 0.0
        %v1351 = vadd.f32 %v1349, %v1350
        %v1352 = vsel %vm1344, %v1336, 0.0
        %v1353 = vadd.f32 %v1351, %v1352
        %v1354 = vsel %vm1344, %v1338, 0.0
        %v1355 = vadd.f32 %v1353, %v1354
        %v1356 = vsel %vm1344, %v1340, 0.0
        %v1357 = vadd.f32 %v1355, %v1356
        %v1358 = vsel %vm1344, %v1342, 0.0
        %v1359 = vadd.f32 %v1357, %v1358
        %v1360 = vsel %vm1344, %v1329, 0.0
        %v1361 = vsel %vm1344, %v1331, 0.0
        %v1362 = vadd.f32 %v1360, %v1361
        %v1363 = vsel %vm1344, %v1333, 0.0
        %v1364 = vadd.f32 %v1362, %v1363
        %v1365 = vsel %vm1344, %v1335, 0.0
        %v1366 = vadd.f32 %v1364, %v1365
        %v1367 = vsel %vm1344, %v1337, 0.0
        %v1368 = vadd.f32 %v1366, %v1367
        %v1369 = vsel %vm1344, %v1339, 0.0
        %v1370 = vadd.f32 %v1368, %v1369
        %v1371 = vsel %vm1344, %v1341, 0.0
        %v1372 = vadd.f32 %v1370, %v1371
        %v1373 = vsel %vm1344, %v1343, 0.0
        %v1374 = vadd.f32 %v1372, %v1373
        %v1375 = vsel %vm751, %v433, %v1359
        %v1376 = vsel %vm751, %v434, %v1374
        %v1377 = vld [vmem:[%s8] sm:$0xff]
        %v1378 = vld [vmem:[%s8 + $0x8] sm:$0xff]
        %v1379 = vld [vmem:[%s8 + $0x10] sm:$0xff]
        %v1380 = vld [vmem:[%s8 + $0x18] sm:$0xff]
        %v1381 = vld [vmem:[%s8 + $0x20] sm:$0xff]
        %v1382 = vld [vmem:[%s8 + $0x28] sm:$0xff]
        %v1383 = vld [vmem:[%s8 + $0x30] sm:$0xff]
        %v1384 = vld [vmem:[%s8 + $0x38] sm:$0xff]
        %v1385 = vld [vmem:[%s9] sm:$0x1]
        %v1387 = vlaneseq
        %v1388 = vshrl.u32 %v1387, 7
        %v1389 = vsub.s32 0, %v1388
        %v1390 = vrot.slane %v1385, %v1389
        %v1393 = vsel %vm557, %v1375, 0
        %v1396 = vsel %vm557, %v1376, 0
        %1398 = vmatprep.subr.mxu0 0.0
        %1399 = vmatpush1.msra.mxu0 %v1377
        %1400 = vmatprep.subr.mxu0 0.0
        %1401 = vmatpush1.msra.mxu0 %v1378
        %1402 = vmatprep.subr.mxu0 0.0
        %1403 = vmatpush1.msra.mxu0 %v1379
        %1404 = vmatprep.subr.mxu0 0.0
        %1405 = vmatpush1.msra.mxu0 %v1380
        %1406 = vmatprep.subr.mxu0 0.0
        %1407 = vmatpush1.msra.mxu0 %v1381
        %1408 = vmatprep.subr.mxu0 0.0
        %1409 = vmatpush1.msra.mxu0 %v1382
        %1410 = vmatprep.subr.mxu0 0.0
        %1411 = vmatpush1.msra.mxu0 %v1383
        %1412 = vmatprep.subr.mxu0 0.0
        %1413 = vmatpush1.msra.mxu0 %v1384
        %1414 = vmatprep.subr.mxu0 0.0
        %1415 = vmatpush1.msra.mxu0 0.0
        %1416 = vmatprep.subr.mxu0 0.0
        %1417 = vmatpush1.msra.mxu0 0.0
        %1418 = vmatprep.subr.mxu0 0.0
        %1419 = vmatpush1.msra.mxu0 0.0
        %1420 = vmatprep.subr.mxu0 0.0
        %1421 = vmatpush1.msra.mxu0 0.0
        %1422 = vmatprep.subr.mxu0 0.0
        %1423 = vmatpush1.msra.mxu0 0.0
        %1424 = vmatprep.subr.mxu0 0.0
        %1425 = vmatpush1.msra.mxu0 0.0
        %1426 = vmatprep.subr.mxu0 0.0
        %1427 = vmatpush1.msra.mxu0 0.0
        %1428 = vmatprep.subr.mxu0 0.0
        %1429 = vmatpush1.msra.mxu0 0.0
        %1430 = vmatprep.subr.mxu0 0.0
        %1431 = vmatpush1.msra.mxu0 0.0
        %1432 = vmatprep.subr.mxu0 0.0
        %1433 = vmatpush1.msra.mxu0 0.0
        %1434 = vmatprep.subr.mxu0 0.0
        %1435 = vmatpush1.msra.mxu0 0.0
        %1436 = vmatprep.subr.mxu0 0.0
        %1437 = vmatpush1.msra.mxu0 0.0
        %1438 = vmatprep.subr.mxu0 0.0
        %1439 = vmatpush1.msra.mxu0 0.0
        %1440 = vmatprep.subr.mxu0 0.0
        %1441 = vmatpush1.msra.mxu0 0.0
        %1442 = vmatprep.subr.mxu0 0.0
        %1443 = vmatpush1.msra.mxu0 0.0
        %1444 = vmatprep.subr.mxu0 0.0
        %1445 = vmatpush1.msra.mxu0 0.0
        %1446 = vmatprep.subr.mxu0 0.0
        %1447 = vmatpush1.msra.mxu0 0.0
        %1448 = vmatprep.subr.mxu0 0.0
        %1449 = vmatpush1.msra.mxu0 0.0
        %1450 = vmatprep.subr.mxu0 0.0
        %1451 = vmatpush1.msra.mxu0 0.0
        %1452 = vmatprep.subr.mxu0 0.0
        %1453 = vmatpush1.msra.mxu0 0.0
        %1454 = vmatprep.subr.mxu0 0.0
        %1455 = vmatpush1.msra.mxu0 0.0
        %1456 = vmatprep.subr.mxu0 0.0
        %1457 = vmatpush1.msra.mxu0 0.0
        %1458 = vmatprep.subr.mxu0 0.0
        %1459 = vmatpush1.msra.mxu0 0.0
        %1460 = vmatprep.subr.mxu0 0.0
        %1461 = vmatpush1.msra.mxu0 0.0
        %1462 = vmatprep.mubr.f32.mxu0 0.0
        %1463 = vmatmul.mubr.f32.gmra.mrb[0].mxu0 %v1393
        %v1464 = vpop.f32.mrb[0].mxu0
        %v1465 = vadd.f32 %v1390, %v1464
        %v1466 = vpop.f32.mrb[0].mxu0
        %1467 = vmatprep.mubr.f32.mxu0 0.0
        %1468 = vmatmul.mubr.f32.gmra.mrb[0].mxu0 %v1396
        %v1469 = vpop.f32.mrb[0].mxu0
        %v1470 = vadd.f32 %v1390, %v1469
        %v1471 = vpop.f32.mrb[0].mxu0
        %1472 = vdwg.mxu0
        %v1473 = vtanh.pop %v1465
        %v1474 = vtanh.pop %v1470
        %v1475 = vsub.f32 1.0, %v897
        %v1476 = vsub.f32 1.0, %v899
        %v1477 = vmul.f32 %v1475, %v766
        %v1478 = vmul.f32 %v1476, %v781
        %v1479 = vmul.f32 %v897, %v1473
        %v1480 = vmul.f32 %v899, %v1474
        %v1481 = vadd.f32 %v1477, %v1479
        %v1482 = vadd.f32 %v1478, %v1480
        %s1483 = smul.u32 %s24, 16
        %s1484 = scalar_lea.vmem [#allocation2], %s1483
        %1485 = vst.msk [vmem:[%s1484] sm:$0xff] %vm751, %v1481
        %1486 = vst.msk [vmem:[%s1484 + $0x8] sm:$0xff] %vm751, %v1482
        %v1487 = vld [vmem:[#allocation2] sm:$0xff]
        %v1488 = vld [vmem:[#allocation2 + $0x8] sm:$0xff]
        %v1489 = vld [vmem:[#allocation2 + $0x10] sm:$0xff]
        %v1490 = vld [vmem:[#allocation2 + $0x18] sm:$0xff]
        %v1491 = vld [vmem:[#allocation2 + $0x20] sm:$0xff]
        %v1492 = vld [vmem:[#allocation2 + $0x28] sm:$0xff]
        %v1493 = vld [vmem:[#allocation2 + $0x30] sm:$0xff]
        %v1494 = vld [vmem:[#allocation2 + $0x38] sm:$0xff]
        %v1495 = vld [vmem:[%s3] sm:$0xff]
        %v1496 = vld [vmem:[%s3 + $0x8] sm:$0xff]
        %v1497 = vld [vmem:[%s3 + $0x10] sm:$0xff]
        %v1498 = vld [vmem:[%s3 + $0x18] sm:$0xff]
        %v1499 = vld [vmem:[%s3 + $0x20] sm:$0xff]
        %v1500 = vld [vmem:[%s3 + $0x28] sm:$0xff]
        %v1501 = vld [vmem:[%s3 + $0x30] sm:$0xff]
        %v1502 = vld [vmem:[%s3 + $0x38] sm:$0xff]
        %1503 = vset.pattern.permute.xlu0 0
        %1504 = vperm.xlu0 %1503, %v1495
        %v1505 = vpop.permute.xlu0 %1504
        %1506 = vset.pattern.permute.xlu0 0
        %1507 = vperm.xlu0 %1506, %v1496
        %v1508 = vpop.permute.xlu0 %1507
        %1509 = vset.pattern.permute.xlu0 0
        %1510 = vperm.xlu0 %1509, %v1497
        %v1511 = vpop.permute.xlu0 %1510
        %1512 = vset.pattern.permute.xlu0 0
        %1513 = vperm.xlu0 %1512, %v1498
        %v1514 = vpop.permute.xlu0 %1513
        %1515 = vset.pattern.permute.xlu0 0
        %1516 = vperm.xlu0 %1515, %v1499
        %v1517 = vpop.permute.xlu0 %1516
        %1518 = vset.pattern.permute.xlu0 0
        %1519 = vperm.xlu0 %1518, %v1500
        %v1520 = vpop.permute.xlu0 %1519
        %1521 = vset.pattern.permute.xlu0 0
        %1522 = vperm.xlu0 %1521, %v1501
        %v1523 = vpop.permute.xlu0 %1522
        %1524 = vset.pattern.permute.xlu0 0
        %1525 = vperm.xlu0 %1524, %v1502
        %v1526 = vpop.permute.xlu0 %1525
        %vm1527 = vcmp.eq.s32.totalorder %v1505, %v460
        %vm1528 = vcmp.eq.s32.totalorder %v1508, %v460
        %vm1529 = vcmp.eq.s32.totalorder %v1511, %v460
        %vm1530 = vcmp.eq.s32.totalorder %v1514, %v460
        %vm1531 = vcmp.eq.s32.totalorder %v1517, %v460
        %vm1532 = vcmp.eq.s32.totalorder %v1520, %v460
        %vm1533 = vcmp.eq.s32.totalorder %v1523, %v460
        %vm1534 = vcmp.eq.s32.totalorder %v1526, %v460
        %v1535 = vsel %vm1527, 1, 0
        %v1536 = vsel %vm1528, 1, 0
        %v1537 = vsel %vm1529, 1, 0
        %v1538 = vsel %vm1530, 1, 0
        %v1539 = vsel %vm1531, 1, 0
        %v1540 = vsel %vm1532, 1, 0
        %v1541 = vsel %vm1533, 1, 0
        %v1542 = vsel %vm1534, 1, 0
        %v1543 = vcvt.s32.f32 %v1535
        %v1544 = vcvt.s32.f32 %v1536
        %v1545 = vcvt.s32.f32 %v1537
        %v1546 = vcvt.s32.f32 %v1538
        %v1547 = vcvt.s32.f32 %v1539
        %v1548 = vcvt.s32.f32 %v1540
        %v1549 = vcvt.s32.f32 %v1541
        %v1550 = vcvt.s32.f32 %v1542
        %v1552 = vsel %vm557, %v1543, 0
        %v1555 = vsel %vm557, %v1544, 0
        %v1558 = vsel %vm557, %v1545, 0
        %v1561 = vsel %vm557, %v1546, 0
        %v1564 = vsel %vm557, %v1547, 0
        %v1567 = vsel %vm557, %v1548, 0
        %v1570 = vsel %vm557, %v1549, 0
        %v1573 = vsel %vm557, %v1550, 0
        %1575 = vmatprep.subr.mxu0 0.0
        %1576 = vmatpush1.msra.mxu0 %v1487
        %1577 = vmatprep.subr.mxu0 0.0
        %1578 = vmatpush1.msra.mxu0 %v1488
        %1579 = vmatprep.subr.mxu0 0.0
        %1580 = vmatpush1.msra.mxu0 %v1489
        %1581 = vmatprep.subr.mxu0 0.0
        %1582 = vmatpush1.msra.mxu0 %v1490
        %1583 = vmatprep.subr.mxu0 0.0
        %1584 = vmatpush1.msra.mxu0 %v1491
        %1585 = vmatprep.subr.mxu0 0.0
        %1586 = vmatpush1.msra.mxu0 %v1492
        %1587 = vmatprep.subr.mxu0 0.0
        %1588 = vmatpush1.msra.mxu0 %v1493
        %1589 = vmatprep.subr.mxu0 0.0
        %1590 = vmatpush1.msra.mxu0 %v1494
        %1591 = vmatprep.subr.mxu0 0.0
        %1592 = vmatpush1.msra.mxu0 0.0
        %1593 = vmatprep.subr.mxu0 0.0
        %1594 = vmatpush1.msra.mxu0 0.0
        %1595 = vmatprep.subr.mxu0 0.0
        %1596 = vmatpush1.msra.mxu0 0.0
        %1597 = vmatprep.subr.mxu0 0.0
        %1598 = vmatpush1.msra.mxu0 0.0
        %1599 = vmatprep.subr.mxu0 0.0
        %1600 = vmatpush1.msra.mxu0 0.0
        %1601 = vmatprep.subr.mxu0 0.0
        %1602 = vmatpush1.msra.mxu0 0.0
        %1603 = vmatprep.subr.mxu0 0.0
        %1604 = vmatpush1.msra.mxu0 0.0
        %1605 = vmatprep.subr.mxu0 0.0
        %1606 = vmatpush1.msra.mxu0 0.0
        %1607 = vmatprep.subr.mxu0 0.0
        %1608 = vmatpush1.msra.mxu0 0.0
        %1609 = vmatprep.subr.mxu0 0.0
        %1610 = vmatpush1.msra.mxu0 0.0
        %1611 = vmatprep.subr.mxu0 0.0
        %1612 = vmatpush1.msra.mxu0 0.0
        %1613 = vmatprep.subr.mxu0 0.0
        %1614 = vmatpush1.msra.mxu0 0.0
        %1615 = vmatprep.subr.mxu0 0.0
        %1616 = vmatpush1.msra.mxu0 0.0
        %1617 = vmatprep.subr.mxu0 0.0
        %1618 = vmatpush1.msra.mxu0 0.0
        %1619 = vmatprep.subr.mxu0 0.0
        %1620 = vmatpush1.msra.mxu0 0.0
        %1621 = vmatprep.subr.mxu0 0.0
        %1622 = vmatpush1.msra.mxu0 0.0
        %1623 = vmatprep.subr.mxu0 0.0
        %1624 = vmatpush1.msra.mxu0 0.0
        %1625 = vmatprep.subr.mxu0 0.0
        %1626 = vmatpush1.msra.mxu0 0.0
        %1627 = vmatprep.subr.mxu0 0.0
        %1628 = vmatpush1.msra.mxu0 0.0
        %1629 = vmatprep.subr.mxu0 0.0
        %1630 = vmatpush1.msra.mxu0 0.0
        %1631 = vmatprep.subr.mxu0 0.0
        %1632 = vmatpush1.msra.mxu0 0.0
        %1633 = vmatprep.subr.mxu0 0.0
        %1634 = vmatpush1.msra.mxu0 0.0
        %1635 = vmatprep.subr.mxu0 0.0
        %1636 = vmatpush1.msra.mxu0 0.0
        %1637 = vmatprep.subr.mxu0 0.0
        %1638 = vmatpush1.msra.mxu0 0.0
        %1639 = vmatprep.mubr.f32.mxu0 0.0
        %1640 = vmatmul.mubr.f32.gmra.mrb[0].mxu0 %v1552
        %v1641 = vpop.f32.mrb[0].mxu0
        %v1642 = vadd.f32 0.0, %v1641
        %v1643 = vpop.f32.mrb[0].mxu0
        %1644 = vmatprep.mubr.f32.mxu0 0.0
        %1645 = vmatmul.mubr.f32.gmra.mrb[0].mxu0 %v1555
        %v1646 = vpop.f32.mrb[0].mxu0
        %v1647 = vadd.f32 0.0, %v1646
        %v1648 = vpop.f32.mrb[0].mxu0
        %1649 = vmatprep.mubr.f32.mxu0 0.0
        %1650 = vmatmul.mubr.f32.gmra.mrb[0].mxu0 %v1558
        %v1651 = vpop.f32.mrb[0].mxu0
        %v1652 = vadd.f32 0.0, %v1651
        %v1653 = vpop.f32.mrb[0].mxu0
        %1654 = vmatprep.mubr.f32.mxu0 0.0
        %1655 = vmatmul.mubr.f32.gmra.mrb[0].mxu0 %v1561
        %v1656 = vpop.f32.mrb[0].mxu0
        %v1657 = vadd.f32 0.0, %v1656
        %v1658 = vpop.f32.mrb[0].mxu0
        %1659 = vmatprep.mubr.f32.mxu0 0.0
        %1660 = vmatmul.mubr.f32.gmra.mrb[0].mxu0 %v1564
        %v1661 = vpop.f32.mrb[0].mxu0
        %v1662 = vadd.f32 0.0, %v1661
        %v1663 = vpop.f32.mrb[0].mxu0
        %1664 = vmatprep.mubr.f32.mxu0 0.0
        %1665 = vmatmul.mubr.f32.gmra.mrb[0].mxu0 %v1567
        %v1666 = vpop.f32.mrb[0].mxu0
        %v1667 = vadd.f32 0.0, %v1666
        %v1668 = vpop.f32.mrb[0].mxu0
        %1669 = vmatprep.mubr.f32.mxu0 0.0
        %1670 = vmatmul.mubr.f32.gmra.mrb[0].mxu0 %v1570
        %v1671 = vpop.f32.mrb[0].mxu0
        %v1672 = vadd.f32 0.0, %v1671
        %v1673 = vpop.f32.mrb[0].mxu0
        %1674 = vmatprep.mubr.f32.mxu0 0.0
        %1675 = vmatmul.mubr.f32.gmra.mrb[0].mxu0 %v1573
        %v1676 = vpop.f32.mrb[0].mxu0
        %v1677 = vadd.f32 0.0, %v1676
        %v1678 = vpop.f32.mrb[0].mxu0
        %1679 = vdwg.mxu0
        %v1680 = vsel %vm751, %v1642, 0.0
        %v1681 = vsel %vm751, %v1647, 0.0
        %v1682 = vadd.f32 %v1680, %v1681
        %v1683 = vsel %vm751, %v1652, 0.0
        %v1684 = vadd.f32 %v1682, %v1683
        %v1685 = vsel %vm751, %v1657, 0.0
        %v1686 = vadd.f32 %v1684, %v1685
        %v1687 = vsel %vm751, %v1662, 0.0
        %v1688 = vadd.f32 %v1686, %v1687
        %v1689 = vsel %vm751, %v1667, 0.0
        %v1690 = vadd.f32 %v1688, %v1689
        %v1691 = vsel %vm751, %v1672, 0.0
        %v1692 = vadd.f32 %v1690, %v1691
        %v1693 = vsel %vm751, %v1677, 0.0
        %v1694 = vadd.f32 %v1692, %v1693
        %v1695 = vld [vmem:[%s2] sm:$0xff]
        %1697 = vrot.lane.b32.xlu0 %v1694, 32
        %v1698 = vpop.permute.xlu0 %1697
        %v1700 = vsel %vm751, %v1695, %v1698
        %v1701 = vld [vmem:[%s10] sm:$0xff]
        %v1702 = vld [vmem:[%s10 + $0x8] sm:$0xff]
        %v1703 = vld [vmem:[%s10 + $0x10] sm:$0xff]
        %v1704 = vld [vmem:[%s10 + $0x18] sm:$0xff]
        %v1705 = vld [vmem:[%s10 + $0x20] sm:$0xff]
        %v1706 = vld [vmem:[%s10 + $0x28] sm:$0xff]
        %v1707 = vld [vmem:[%s10 + $0x30] sm:$0xff]
        %v1708 = vld [vmem:[%s10 + $0x38] sm:$0xff]
        %v1709 = vld [vmem:[%s11] sm:$0x1]
        %v1711 = vlaneseq
        %v1712 = vshrl.u32 %v1711, 7
        %v1713 = vsub.s32 0, %v1712
        %v1714 = vrot.slane %v1709, %v1713
        %v1717 = vsel %vm557, %v1700, 0
        %1719 = vmatprep.subr.mxu0 0.0
        %1720 = vmatpush1.msra.mxu0 %v1701
        %1721 = vmatprep.subr.mxu0 0.0
        %1722 = vmatpush1.msra.mxu0 %v1702
        %1723 = vmatprep.subr.mxu0 0.0
        %1724 = vmatpush1.msra.mxu0 %v1703
        %1725 = vmatprep.subr.mxu0 0.0
        %1726 = vmatpush1.msra.mxu0 %v1704
        %1727 = vmatprep.subr.mxu0 0.0
        %1728 = vmatpush1.msra.mxu0 %v1705
        %1729 = vmatprep.subr.mxu0 0.0
        %1730 = vmatpush1.msra.mxu0 %v1706
        %1731 = vmatprep.subr.mxu0 0.0
        %1732 = vmatpush1.msra.mxu0 %v1707
        %1733 = vmatprep.subr.mxu0 0.0
        %1734 = vmatpush1.msra.mxu0 %v1708
        %1735 = vmatprep.subr.mxu0 0.0
        %1736 = vmatpush1.msra.mxu0 0.0
        %1737 = vmatprep.subr.mxu0 0.0
        %1738 = vmatpush1.msra.mxu0 0.0
        %1739 = vmatprep.subr.mxu0 0.0
        %1740 = vmatpush1.msra.mxu0 0.0
        %1741 = vmatprep.subr.mxu0 0.0
        %1742 = vmatpush1.msra.mxu0 0.0
        %1743 = vmatprep.subr.mxu0 0.0
        %1744 = vmatpush1.msra.mxu0 0.0
        %1745 = vmatprep.subr.mxu0 0.0
        %1746 = vmatpush1.msra.mxu0 0.0
        %1747 = vmatprep.subr.mxu0 0.0
        %1748 = vmatpush1.msra.mxu0 0.0
        %1749 = vmatprep.subr.mxu0 0.0
        %1750 = vmatpush1.msra.mxu0 0.0
        %1751 = vmatprep.subr.mxu0 0.0
        %1752 = vmatpush1.msra.mxu0 0.0
        %1753 = vmatprep.subr.mxu0 0.0
        %1754 = vmatpush1.msra.mxu0 0.0
        %1755 = vmatprep.subr.mxu0 0.0
        %1756 = vmatpush1.msra.mxu0 0.0
        %1757 = vmatprep.subr.mxu0 0.0
        %1758 = vmatpush1.msra.mxu0 0.0
        %1759 = vmatprep.subr.mxu0 0.0
        %1760 = vmatpush1.msra.mxu0 0.0
        %1761 = vmatprep.subr.mxu0 0.0
        %1762 = vmatpush1.msra.mxu0 0.0
        %1763 = vmatprep.subr.mxu0 0.0
        %1764 = vmatpush1.msra.mxu0 0.0
        %1765 = vmatprep.subr.mxu0 0.0
        %1766 = vmatpush1.msra.mxu0 0.0
        %1767 = vmatprep.subr.mxu0 0.0
        %1768 = vmatpush1.msra.mxu0 0.0
        %1769 = vmatprep.subr.mxu0 0.0
        %1770 = vmatpush1.msra.mxu0 0.0
        %1771 = vmatprep.subr.mxu0 0.0
        %1772 = vmatpush1.msra.mxu0 0.0
        %1773 = vmatprep.subr.mxu0 0.0
        %1774 = vmatpush1.msra.mxu0 0.0
        %1775 = vmatprep.subr.mxu0 0.0
        %1776 = vmatpush1.msra.mxu0 0.0
        %1777 = vmatprep.subr.mxu0 0.0
        %1778 = vmatpush1.msra.mxu0 0.0
        %1779 = vmatprep.subr.mxu0 0.0
        %1780 = vmatpush1.msra.mxu0 0.0
        %1781 = vmatprep.subr.mxu0 0.0
        %1782 = vmatpush1.msra.mxu0 0.0
        %1783 = vmatprep.mubr.f32.mxu0 0.0
        %1784 = vmatmul.mubr.f32.gmra.mrb[0].mxu0 %v1717
        %v1785 = vpop.f32.mrb[0].mxu0
        %v1786 = vadd.f32 %v1714, %v1785
        %v1787 = vpop.f32.mrb[0].mxu0
        %1788 = vdwg.mxu0
        %v1789 = vmax.f32 %v1786, 0.0
        %1790 = vst.msk [vmem:[#allocation3] sm:$0xff] %vm751, %v1789
        // Predicated region
        $region73: #{jtnn_fused_forward.1} parent=67 // pred_check
          %p1791 = pneg %p299
        $region74: #{jtnn_fused_forward.1} parent=67 // pred_check_branch
          %1793 = sbr.rel (%p1791) target = $region76
        $region75: #{jtnn_fused_forward.1} parent=67 // pred_region
          %s1795 = ssub.s32 128, 128
          %1796 = vsyncadd [#allocation4], %s1795
          %s1798 = sshll.u32 [#allocation3], 4
          %s1799 = int_to_ptr.vmem [resolvable:$true] %s1798
          %1801 = dma.vmem_to_hbm [thread:$0]  %s1799, 128, %s12, [#allocation4]
        $region76: #{jtnn_fused_forward.1} parent=67 // pred_fallthru
          _
        // Predicated region
        $region77: #{jtnn_fused_forward.1} parent=67 // pred_check
          %p1802 = pneg %p299
        $region78: #{jtnn_fused_forward.1} parent=67 // pred_check_branch
          %1804 = sbr.rel (%p1802) target = $region80
        $region79: #{jtnn_fused_forward.1} parent=67 // pred_region
          %1805 = dma.done [#allocation4], 128
        $region80: #{jtnn_fused_forward.1} parent=67 // pred_fallthru
          _
      $region68: #{jtnn_fused_forward.1} parent=5 // pred_fallthru
        _
      %p1806 = scmp.le.s32.totalorder 2, %s19
      // Predicated region
      $region81: #{jtnn_fused_forward.1} parent=5 // pred_check
        %p1807 = pneg %p1806
      $region82: #{jtnn_fused_forward.1} parent=5 // pred_check_branch
        %1809 = sbr.rel (%p1807) target = $region84
      $region83: #{jtnn_fused_forward.1} parent=5 // pred_region
        %s1810 = ssub.s32 %s19, 2
      $region84: #{jtnn_fused_forward.1} parent=5 // pred_fallthru
        _
    $region6: #{jtnn_fused_forward.1} parent=1 // loop_footer
      %s23 = sadd.s32 1, %s19
    $region7: #{jtnn_fused_forward.1} parent=1 // loop_footer_branch
      %18 = sbr.rel target = $region3
    $region8: #{jtnn_fused_forward.1} parent=1 // loop_exit
      _
    %1811 = vsyncpa [#allocation4], 1
    %s1812 = scalar_lea.sflag [#allocation4], 1
    %1813 = vsyncpa %s1812, 1

</llo_original>
